<compile_context>
chip_gen: v5e
topology: v5e:2x2
jax: 0.10.0
libtpu: 0.0.40
codegen_flags: <defaults>
</compile_context>

<pallas_src>
import jax
import jax.numpy as jnp
from jax.experimental import pallas as pl
from jax.experimental.pallas import tpu as pltpu


# ---------------------------------------------------------------------------
# Fused kernel: bilinear grid_sample (zeros padding, align_corners=False)
# expressed as a one-hot (N_tile, S) @ (S, C) MXU matmul, fused with the
# sigmoid-weighted blend of x_frame and the sampled mosaic.
# Layout: pixels on sublanes, channels on lanes (lane-dense output).
# ---------------------------------------------------------------------------
def _make_fuse_kernel(hm, wm):
    s_size = hm * wm

    def kernel(g_ref, mos_ref, frm_ref, wl_ref, o_ref):
        # g_ref:   (1, TN, 2)  warped sampling grid, [..., 0]=x, [..., 1]=y in [-1,1]
        # mos_ref: (1, S,  C)  mosaic (pixels on sublanes, channels on lanes)
        # frm_ref: (1, TN, C)  frame tile
        # wl_ref:  (1, C)      blend logits
        # o_ref:   (1, TN, C)
        g = g_ref[0]                               # (TN, 2)
        gx = g[:, 0:1]                             # (TN, 1)
        gy = g[:, 1:2]                             # (TN, 1)
        tn = gx.shape[0]

        # un-normalize (align_corners=False convention of F.grid_sample)
        fx = (gx + 1.0) * (0.5 * wm) - 0.5
        fy = (gy + 1.0) * (0.5 * hm) - 0.5
        x0f = jnp.floor(fx)
        y0f = jnp.floor(fy)
        wx1 = fx - x0f
        wy1 = fy - y0f
        wx0 = 1.0 - wx1
        wy0 = 1.0 - wy1
        x0 = x0f.astype(jnp.int32)
        y0 = y0f.astype(jnp.int32)
        x1 = x0 + 1
        y1 = y0 + 1

        iota_s = jax.lax.broadcasted_iota(jnp.int32, (tn, s_size), 1)   # lane index

        def corner(xi, yi, w):
            inb = (xi >= 0) & (xi < wm) & (yi >= 0) & (yi < hm)
            w = jnp.where(inb, w, 0.0)                               # zeros padding
            s_idx = jnp.clip(yi, 0, hm - 1) * wm + jnp.clip(xi, 0, wm - 1)
            return jnp.where(iota_s == s_idx, w, 0.0)                # (TN, S)

        m = (corner(x0, y0, wx0 * wy0) + corner(x1, y0, wx1 * wy0)
             + corner(x0, y1, wx0 * wy1) + corner(x1, y1, wx1 * wy1))

        # MXU: (TN, S) @ (S, C) with bf16 operands, f32 accumulation.
        sampled = jnp.dot(m.astype(jnp.bfloat16),
                          mos_ref[0].astype(jnp.bfloat16),
                          preferred_element_type=jnp.float32)        # (TN, C)

        wsig = jax.nn.sigmoid(wl_ref[...])                           # (1, C)
        o_ref[0] = (1.0 - wsig) * frm_ref[0] + wsig * sampled

    return kernel


def _pick_tile_n(n, preferred=512):
    """Largest multiple-of-8 divisor of n that is <= preferred, else n."""
    if n <= preferred:
        return n
    best = n
    for t in range(8, preferred + 1, 8):
        if n % t == 0:
            best = t
    return best


def warp_fuse_pallas(grid_bn2, x_mosaic_sc, x_frame_nc, w_logits, hm, wm,
                     tile_n=512):
    """grid_bn2: (B,N,2); x_mosaic_sc: (B,S,C); x_frame_nc: (B,N,C); w_logits: (1,C)."""
    b, n, c = x_frame_nc.shape
    s = x_mosaic_sc.shape[1]
    tn = _pick_tile_n(n, tile_n)
    kernel = _make_fuse_kernel(hm, wm)
    # TODO(synk): for very large mosaics (S*C block > VMEM) add an S/C grid axis
    # with an f32 VMEM accumulator; not needed at these shapes.
    return pl.pallas_call(
        kernel,
        out_shape=jax.ShapeDtypeStruct((b, n, c), jnp.float32),
        grid=(b, n // tn),
        in_specs=[
            pl.BlockSpec((1, tn, 2), lambda bi, ni: (bi, ni, 0)),
            pl.BlockSpec((1, s, c), lambda bi, ni: (bi, 0, 0)),   # same block across ni
            pl.BlockSpec((1, tn, c), lambda bi, ni: (bi, ni, 0)),
            pl.BlockSpec((1, c), lambda bi, ni: (0, 0)),
        ],
        out_specs=pl.BlockSpec((1, tn, c), lambda bi, ni: (bi, ni, 0)),
        compiler_params=pltpu.CompilerParams(
            dimension_semantics=("parallel", "arbitrary"),
            vmem_limit_bytes=32 * 1024 * 1024),
    )(grid_bn2, x_mosaic_sc, x_frame_nc, w_logits)


# ---------------------------------------------------------------------------
# offset_net collapse: four stacked 1x1 convs with no nonlinearity == one
# 2x2 affine map. Precomputed once in the wrapper (plain jnp).
# ---------------------------------------------------------------------------
def _collapse_offset_net(conv_params):
    w1, b1, w2, b2, w3, b3, w4, b4 = conv_params
    w_eff = w4 @ w3 @ w2 @ w1                            # (2, 2)
    b_eff = w4 @ (w3 @ (w2 @ b1 + b2) + b3) + b4         # (2, 1)
    return w_eff, b_eff


# ---------------------------------------------------------------------------
# WarpNet forward. Glue (nearest-neighbor coord upsampling, NCHW <-> channels-
# on-lanes transposes, the collapsed 2x2 affine) is plain JAX; the grid_sample
# + blend compute runs in the Pallas kernel.
# ---------------------------------------------------------------------------
def warpnet_forward(x_frame, x_mosaic, coords, conv_params, w_logits):
    b, c, h, w = x_frame.shape
    hm, wm = x_mosaic.shape[-2], x_mosaic.shape[-1]
    h0, w0 = coords.shape[1], coords.shape[2]
    n = h * w

    # coords (B,H0,W0,2) -> NCHW (B,2,H0,W0)  [== .transpose(3,1).transpose(3,2)]
    coords_nchw = jnp.transpose(coords, (0, 3, 1, 2))

    # F.interpolate(..., size=(H,W), mode='nearest'):  src = floor(dst * in / out)
    idx_h = (jnp.arange(h) * h0) // h
    idx_w = (jnp.arange(w) * w0) // w
    coords_up = coords_nchw[:, :, idx_h[:, None], idx_w[None, :]]      # (B,2,H,W)

    # collapsed offset net: one 2x2 affine per pixel
    w_eff, b_eff = _collapse_offset_net(conv_params)
    offset = (jnp.einsum('oc,bchw->bohw', w_eff, coords_up)
              + b_eff.reshape(1, 2, 1, 1))                             # (B,2,H,W)

    # warped sampling grid, laid out (B, N, 2) for the channels-on-lanes kernel
    grid_nchw = coords_up + offset
    grid_bn2 = jnp.transpose(grid_nchw.reshape(b, 2, n), (0, 2, 1))    # (B,N,2)

    # channels-on-lanes slabs
    x_frame_nc = jnp.transpose(x_frame.reshape(b, c, n), (0, 2, 1))          # (B,N,C)
    x_mosaic_sc = jnp.transpose(x_mosaic.reshape(b, c, hm * wm), (0, 2, 1))  # (B,S,C)

    x_fuse_nc = warp_fuse_pallas(grid_bn2, x_mosaic_sc, x_frame_nc,
                                 w_logits, hm, wm)
    x_fuse = jnp.transpose(x_fuse_nc, (0, 2, 1)).reshape(b, c, h, w)
    return x_fuse, offset


# ---------------------------------------------------------------------------
# Pure-JAX reference (layer-by-layer offset net + explicit grid_sample) for a
# correctness check of the Pallas kernel + the algebraic collapse.
# ---------------------------------------------------------------------------
def _grid_sample_ref_one(img, gx, gy):
    # img: (C, Hm, Wm); gx, gy: (H, W) normalized coords
    c, hm, wm = img.shape
    fx = (gx + 1.0) * (0.5 * wm) - 0.5
    fy = (gy + 1.0) * (0.5 * hm) - 0.5
    x0 = jnp.floor(fx).astype(jnp.int32)
    y0 = jnp.floor(fy).astype(jnp.int32)
    x1, y1 = x0 + 1, y0 + 1
    wx1 = fx - x0
    wy1 = fy - y0
    wx0, wy0 = 1.0 - wx1, 1.0 - wy1

    def corner(xi, yi, wgt):
        inb = (xi >= 0) & (xi < wm) & (yi >= 0) & (yi < hm)
        wgt = jnp.where(inb, wgt, 0.0)
        v = img[:, jnp.clip(yi, 0, hm - 1), jnp.clip(xi, 0, wm - 1)]  # (C,H,W)
        return v * wgt[None]

    return (corner(x0, y0, wx0 * wy0) + corner(x1, y0, wx1 * wy0)
            + corner(x0, y1, wx0 * wy1) + corner(x1, y1, wx1 * wy1))


def warpnet_reference(x_frame, x_mosaic, coords, conv_params, w_logits):
    b, c, h, w = x_frame.shape
    h0, w0 = coords.shape[1], coords.shape[2]
    coords_nchw = jnp.transpose(coords, (0, 3, 1, 2))
    idx_h = (jnp.arange(h) * h0) // h
    idx_w = (jnp.arange(w) * w0) // w
    coords_up = coords_nchw[:, :, idx_h[:, None], idx_w[None, :]]

    w1, b1, w2, b2, w3, b3, w4, b4 = conv_params
    x2n = jnp.transpose(coords_up.reshape(b, 2, h * w), (1, 0, 2)).reshape(2, -1)
    hh = w1 @ x2n + b1
    hh = w2 @ hh + b2
    hh = w3 @ hh + b3
    hh = w4 @ hh + b4
    offset = jnp.transpose(hh.reshape(2, b, h * w), (1, 0, 2)).reshape(b, 2, h, w)

    grid = coords_up + offset
    sampled = jax.vmap(_grid_sample_ref_one)(x_mosaic, grid[:, 0], grid[:, 1])
    wsig = jax.nn.sigmoid(w_logits).reshape(1, c, 1, 1)
    return (1.0 - wsig) * x_frame + wsig * sampled, offset


# ---------------------------------------------------------------------------
def init_params(key):
    dims = [(16, 2), (32, 16), (16, 32), (2, 16)]
    params = []
    for co, ci in dims:
        key, kw, kb = jax.random.split(key, 3)
        params.append(jax.random.normal(kw, (co, ci), jnp.float32) * 0.1)  # 1x1 conv W
        params.append(jax.random.normal(kb, (co, 1), jnp.float32) * 0.1)   # bias
    # nn.Parameter(torch.zeros((1, 2048)))
    w_logits = jnp.zeros((1, 2048), jnp.float32)
    return params, w_logits


if __name__ == "__main__":
    key = jax.random.PRNGKey(0)
    conv_params, w_logits = init_params(key)

    B, C, H, W = 2, 2048, 8, 8       # C fixed at 2048 by the module's weights param
    Hm, Wm = 8, 8
    H0, W0 = 4, 4

    key, k1, k2, k3 = jax.random.split(key, 4)
    x_frame = jax.random.normal(k1, (B, C, H, W), jnp.float32)
    x_mosaic = jax.random.normal(k2, (B, C, Hm, Wm), jnp.float32)
    coords = jax.random.uniform(k3, (B, H0, W0, 2), jnp.float32, -1.0, 1.0)

    x_fuse, offset = jax.jit(warpnet_forward)(
        x_frame, x_mosaic, coords, conv_params, w_logits)
    jax.block_until_ready((x_fuse, offset))

    x_fuse_ref, offset_ref = warpnet_reference(
        x_frame, x_mosaic, coords, conv_params, w_logits)
    assert jnp.allclose(offset, offset_ref, atol=2e-4, rtol=2e-4)
    # 2e-2 tolerance covers the bf16 matmul operands (f32 accumulation).
    assert jnp.allclose(x_fuse, x_fuse_ref, atol=2e-2, rtol=2e-2)

    print("KERNEL_OK")
</pallas_src>

<mosaic_0001>
module attributes {stable_mosaic.version = 11 : i64} {
  func.func @kernel(%arg0: i32, %arg1: i32, %arg2: memref<1x64x2xf32, #tpu.memory_space<vmem>>, %arg3: memref<1x64x2048xf32, #tpu.memory_space<vmem>>, %arg4: memref<1x64x2048xf32, #tpu.memory_space<vmem>>, %arg5: memref<1x2048xf32, #tpu.memory_space<vmem>>, %arg6: memref<1x64x2048xf32, #tpu.memory_space<vmem>>) attributes {dimension_semantics = [#tpu.dimension_semantics<parallel>, #tpu.dimension_semantics<arbitrary>], iteration_bounds = array<i64: 2, 1>, scalar_prefetch = 0 : i64, scratch_operands = 0 : i64, tpu.core_type = #tpu.core_type<tc>, window_params = [{transform_indices = @transform_0, window_bounds = array<i64: 1, 64, 2>}, {transform_indices = @transform_1, window_bounds = array<i64: 1, 64, 2048>}, {transform_indices = @transform_2, window_bounds = array<i64: 1, 64, 2048>}, {pipeline_mode = #tpu.pipeline_mode<synchronous>, transform_indices = @transform_3, window_bounds = array<i64: 1, 2048>}, {transform_indices = @transform_4, window_bounds = array<i64: 1, 64, 2048>}]} {
    %c0 = arith.constant 0 : index
    %c0_0 = arith.constant 0 : index
    %c0_1 = arith.constant 0 : index
    %0 = vector.load %arg2[%c0, %c0_0, %c0_1] : memref<1x64x2xf32, #tpu.memory_space<vmem>>, vector<1x64x2xf32>
    %1 = vector.shape_cast %0 : vector<1x64x2xf32> to vector<64x2xf32>
    %2 = vector.extract_strided_slice %1 {offsets = [0, 0], sizes = [64, 1], strides = [1, 1]} : vector<64x2xf32> to vector<64x1xf32>
    %3 = vector.extract_strided_slice %1 {offsets = [0, 1], sizes = [64, 1], strides = [1, 1]} : vector<64x2xf32> to vector<64x1xf32>
    %cst = arith.constant 1.000000e+00 : f32
    %4 = vector.broadcast %cst : f32 to vector<64x1xf32>
    %5 = arith.addf %2, %4 : vector<64x1xf32>
    %cst_2 = arith.constant 4.000000e+00 : f32
    %6 = vector.broadcast %cst_2 : f32 to vector<64x1xf32>
    %7 = arith.mulf %5, %6 : vector<64x1xf32>
    %cst_3 = arith.constant 5.000000e-01 : f32
    %8 = vector.broadcast %cst_3 : f32 to vector<64x1xf32>
    %9 = arith.subf %7, %8 : vector<64x1xf32>
    %cst_4 = arith.constant 1.000000e+00 : f32
    %10 = vector.broadcast %cst_4 : f32 to vector<64x1xf32>
    %11 = arith.addf %3, %10 : vector<64x1xf32>
    %cst_5 = arith.constant 4.000000e+00 : f32
    %12 = vector.broadcast %cst_5 : f32 to vector<64x1xf32>
    %13 = arith.mulf %11, %12 : vector<64x1xf32>
    %cst_6 = arith.constant 5.000000e-01 : f32
    %14 = vector.broadcast %cst_6 : f32 to vector<64x1xf32>
    %15 = arith.subf %13, %14 : vector<64x1xf32>
    %16 = math.floor %9 : vector<64x1xf32>
    %17 = math.floor %15 : vector<64x1xf32>
    %18 = arith.subf %9, %16 : vector<64x1xf32>
    %19 = arith.subf %15, %17 : vector<64x1xf32>
    %cst_7 = arith.constant 1.000000e+00 : f32
    %20 = vector.broadcast %cst_7 : f32 to vector<64x1xf32>
    %21 = arith.subf %20, %18 : vector<64x1xf32>
    %cst_8 = arith.constant 1.000000e+00 : f32
    %22 = vector.broadcast %cst_8 : f32 to vector<64x1xf32>
    %23 = arith.subf %22, %19 : vector<64x1xf32>
    %24 = arith.fptosi %16 : vector<64x1xf32> to vector<64x1xi32>
    %25 = arith.fptosi %17 : vector<64x1xf32> to vector<64x1xi32>
    %c1_i32 = arith.constant 1 : i32
    %26 = vector.broadcast %c1_i32 : i32 to vector<64x1xi32>
    %27 = arith.addi %24, %26 : vector<64x1xi32>
    %c1_i32_9 = arith.constant 1 : i32
    %28 = vector.broadcast %c1_i32_9 : i32 to vector<64x1xi32>
    %29 = arith.addi %25, %28 : vector<64x1xi32>
    %30 = tpu.iota {dimensions = array<i32: 1>} : vector<64x64xi32>
    %31 = arith.mulf %21, %23 : vector<64x1xf32>
    %c0_i32 = arith.constant 0 : i32
    %32 = vector.broadcast %c0_i32 : i32 to vector<64x1xi32>
    %33 = arith.cmpi sge, %24, %32 : vector<64x1xi32>
    %c8_i32 = arith.constant 8 : i32
    %34 = vector.broadcast %c8_i32 : i32 to vector<64x1xi32>
    %35 = arith.cmpi slt, %24, %34 : vector<64x1xi32>
    %36 = arith.andi %33, %35 : vector<64x1xi1>
    %c0_i32_10 = arith.constant 0 : i32
    %37 = vector.broadcast %c0_i32_10 : i32 to vector<64x1xi32>
    %38 = arith.cmpi sge, %25, %37 : vector<64x1xi32>
    %39 = arith.andi %36, %38 : vector<64x1xi1>
    %c8_i32_11 = arith.constant 8 : i32
    %40 = vector.broadcast %c8_i32_11 : i32 to vector<64x1xi32>
    %41 = arith.cmpi slt, %25, %40 : vector<64x1xi32>
    %42 = arith.andi %39, %41 : vector<64x1xi1>
    %cst_12 = arith.constant 0.000000e+00 : f32
    %43 = vector.broadcast %cst_12 : f32 to vector<64x1xf32>
    %44 = arith.select %42, %31, %43 : vector<64x1xi1>, vector<64x1xf32>
    %c0_i32_13 = arith.constant 0 : i32
    %c7_i32 = arith.constant 7 : i32
    %45 = vector.broadcast %c0_i32_13 : i32 to vector<64x1xi32>
    %46 = arith.maxsi %45, %25 : vector<64x1xi32>
    %47 = vector.broadcast %c7_i32 : i32 to vector<64x1xi32>
    %48 = arith.minsi %47, %46 : vector<64x1xi32>
    %c8_i32_14 = arith.constant 8 : i32
    %49 = vector.broadcast %c8_i32_14 : i32 to vector<64x1xi32>
    %50 = arith.muli %48, %49 : vector<64x1xi32>
    %c0_i32_15 = arith.constant 0 : i32
    %c7_i32_16 = arith.constant 7 : i32
    %51 = vector.broadcast %c0_i32_15 : i32 to vector<64x1xi32>
    %52 = arith.maxsi %51, %24 : vector<64x1xi32>
    %53 = vector.broadcast %c7_i32_16 : i32 to vector<64x1xi32>
    %54 = arith.minsi %53, %52 : vector<64x1xi32>
    %55 = arith.addi %50, %54 : vector<64x1xi32>
    %56 = vector.broadcast %55 : vector<64x1xi32> to vector<64x64xi32>
    %57 = arith.cmpi eq, %30, %56 : vector<64x64xi32>
    %cst_17 = arith.constant 0.000000e+00 : f32
    %58 = vector.shape_cast %44 : vector<64x1xf32> to vector<64x1xf32>
    %59 = vector.broadcast %58 : vector<64x1xf32> to vector<64x64xf32>
    %60 = vector.broadcast %cst_17 : f32 to vector<64x64xf32>
    %61 = arith.select %57, %59, %60 : vector<64x64xi1>, vector<64x64xf32>
    %62 = arith.mulf %18, %23 : vector<64x1xf32>
    %c0_i32_18 = arith.constant 0 : i32
    %63 = vector.broadcast %c0_i32_18 : i32 to vector<64x1xi32>
    %64 = arith.cmpi sge, %27, %63 : vector<64x1xi32>
    %c8_i32_19 = arith.constant 8 : i32
    %65 = vector.broadcast %c8_i32_19 : i32 to vector<64x1xi32>
    %66 = arith.cmpi slt, %27, %65 : vector<64x1xi32>
    %67 = arith.andi %64, %66 : vector<64x1xi1>
    %c0_i32_20 = arith.constant 0 : i32
    %68 = vector.broadcast %c0_i32_20 : i32 to vector<64x1xi32>
    %69 = arith.cmpi sge, %25, %68 : vector<64x1xi32>
    %70 = arith.andi %67, %69 : vector<64x1xi1>
    %c8_i32_21 = arith.constant 8 : i32
    %71 = vector.broadcast %c8_i32_21 : i32 to vector<64x1xi32>
    %72 = arith.cmpi slt, %25, %71 : vector<64x1xi32>
    %73 = arith.andi %70, %72 : vector<64x1xi1>
    %cst_22 = arith.constant 0.000000e+00 : f32
    %74 = vector.broadcast %cst_22 : f32 to vector<64x1xf32>
    %75 = arith.select %73, %62, %74 : vector<64x1xi1>, vector<64x1xf32>
    %c0_i32_23 = arith.constant 0 : i32
    %c7_i32_24 = arith.constant 7 : i32
    %76 = vector.broadcast %c0_i32_23 : i32 to vector<64x1xi32>
    %77 = arith.maxsi %76, %25 : vector<64x1xi32>
    %78 = vector.broadcast %c7_i32_24 : i32 to vector<64x1xi32>
    %79 = arith.minsi %78, %77 : vector<64x1xi32>
    %c8_i32_25 = arith.constant 8 : i32
    %80 = vector.broadcast %c8_i32_25 : i32 to vector<64x1xi32>
    %81 = arith.muli %79, %80 : vector<64x1xi32>
    %c0_i32_26 = arith.constant 0 : i32
    %c7_i32_27 = arith.constant 7 : i32
    %82 = vector.broadcast %c0_i32_26 : i32 to vector<64x1xi32>
    %83 = arith.maxsi %82, %27 : vector<64x1xi32>
    %84 = vector.broadcast %c7_i32_27 : i32 to vector<64x1xi32>
    %85 = arith.minsi %84, %83 : vector<64x1xi32>
    %86 = arith.addi %81, %85 : vector<64x1xi32>
    %87 = vector.broadcast %86 : vector<64x1xi32> to vector<64x64xi32>
    %88 = arith.cmpi eq, %30, %87 : vector<64x64xi32>
    %cst_28 = arith.constant 0.000000e+00 : f32
    %89 = vector.shape_cast %75 : vector<64x1xf32> to vector<64x1xf32>
    %90 = vector.broadcast %89 : vector<64x1xf32> to vector<64x64xf32>
    %91 = vector.broadcast %cst_28 : f32 to vector<64x64xf32>
    %92 = arith.select %88, %90, %91 : vector<64x64xi1>, vector<64x64xf32>
    %93 = arith.addf %61, %92 : vector<64x64xf32>
    %94 = arith.mulf %21, %19 : vector<64x1xf32>
    %c0_i32_29 = arith.constant 0 : i32
    %95 = vector.broadcast %c0_i32_29 : i32 to vector<64x1xi32>
    %96 = arith.cmpi sge, %24, %95 : vector<64x1xi32>
    %c8_i32_30 = arith.constant 8 : i32
    %97 = vector.broadcast %c8_i32_30 : i32 to vector<64x1xi32>
    %98 = arith.cmpi slt, %24, %97 : vector<64x1xi32>
    %99 = arith.andi %96, %98 : vector<64x1xi1>
    %c0_i32_31 = arith.constant 0 : i32
    %100 = vector.broadcast %c0_i32_31 : i32 to vector<64x1xi32>
    %101 = arith.cmpi sge, %29, %100 : vector<64x1xi32>
    %102 = arith.andi %99, %101 : vector<64x1xi1>
    %c8_i32_32 = arith.constant 8 : i32
    %103 = vector.broadcast %c8_i32_32 : i32 to vector<64x1xi32>
    %104 = arith.cmpi slt, %29, %103 : vector<64x1xi32>
    %105 = arith.andi %102, %104 : vector<64x1xi1>
    %cst_33 = arith.constant 0.000000e+00 : f32
    %106 = vector.broadcast %cst_33 : f32 to vector<64x1xf32>
    %107 = arith.select %105, %94, %106 : vector<64x1xi1>, vector<64x1xf32>
    %c0_i32_34 = arith.constant 0 : i32
    %c7_i32_35 = arith.constant 7 : i32
    %108 = vector.broadcast %c0_i32_34 : i32 to vector<64x1xi32>
    %109 = arith.maxsi %108, %29 : vector<64x1xi32>
    %110 = vector.broadcast %c7_i32_35 : i32 to vector<64x1xi32>
    %111 = arith.minsi %110, %109 : vector<64x1xi32>
    %c8_i32_36 = arith.constant 8 : i32
    %112 = vector.broadcast %c8_i32_36 : i32 to vector<64x1xi32>
    %113 = arith.muli %111, %112 : vector<64x1xi32>
    %c0_i32_37 = arith.constant 0 : i32
    %c7_i32_38 = arith.constant 7 : i32
    %114 = vector.broadcast %c0_i32_37 : i32 to vector<64x1xi32>
    %115 = arith.maxsi %114, %24 : vector<64x1xi32>
    %116 = vector.broadcast %c7_i32_38 : i32 to vector<64x1xi32>
    %117 = arith.minsi %116, %115 : vector<64x1xi32>
    %118 = arith.addi %113, %117 : vector<64x1xi32>
    %119 = vector.broadcast %118 : vector<64x1xi32> to vector<64x64xi32>
    %120 = arith.cmpi eq, %30, %119 : vector<64x64xi32>
    %cst_39 = arith.constant 0.000000e+00 : f32
    %121 = vector.shape_cast %107 : vector<64x1xf32> to vector<64x1xf32>
    %122 = vector.broadcast %121 : vector<64x1xf32> to vector<64x64xf32>
    %123 = vector.broadcast %cst_39 : f32 to vector<64x64xf32>
    %124 = arith.select %120, %122, %123 : vector<64x64xi1>, vector<64x64xf32>
    %125 = arith.addf %93, %124 : vector<64x64xf32>
    %126 = arith.mulf %18, %19 : vector<64x1xf32>
    %c0_i32_40 = arith.constant 0 : i32
    %127 = vector.broadcast %c0_i32_40 : i32 to vector<64x1xi32>
    %128 = arith.cmpi sge, %27, %127 : vector<64x1xi32>
    %c8_i32_41 = arith.constant 8 : i32
    %129 = vector.broadcast %c8_i32_41 : i32 to vector<64x1xi32>
    %130 = arith.cmpi slt, %27, %129 : vector<64x1xi32>
    %131 = arith.andi %128, %130 : vector<64x1xi1>
    %c0_i32_42 = arith.constant 0 : i32
    %132 = vector.broadcast %c0_i32_42 : i32 to vector<64x1xi32>
    %133 = arith.cmpi sge, %29, %132 : vector<64x1xi32>
    %134 = arith.andi %131, %133 : vector<64x1xi1>
    %c8_i32_43 = arith.constant 8 : i32
    %135 = vector.broadcast %c8_i32_43 : i32 to vector<64x1xi32>
    %136 = arith.cmpi slt, %29, %135 : vector<64x1xi32>
    %137 = arith.andi %134, %136 : vector<64x1xi1>
    %cst_44 = arith.constant 0.000000e+00 : f32
    %138 = vector.broadcast %cst_44 : f32 to vector<64x1xf32>
    %139 = arith.select %137, %126, %138 : vector<64x1xi1>, vector<64x1xf32>
    %c0_i32_45 = arith.constant 0 : i32
    %c7_i32_46 = arith.constant 7 : i32
    %140 = vector.broadcast %c0_i32_45 : i32 to vector<64x1xi32>
    %141 = arith.maxsi %140, %29 : vector<64x1xi32>
    %142 = vector.broadcast %c7_i32_46 : i32 to vector<64x1xi32>
    %143 = arith.minsi %142, %141 : vector<64x1xi32>
    %c8_i32_47 = arith.constant 8 : i32
    %144 = vector.broadcast %c8_i32_47 : i32 to vector<64x1xi32>
    %145 = arith.muli %143, %144 : vector<64x1xi32>
    %c0_i32_48 = arith.constant 0 : i32
    %c7_i32_49 = arith.constant 7 : i32
    %146 = vector.broadcast %c0_i32_48 : i32 to vector<64x1xi32>
    %147 = arith.maxsi %146, %27 : vector<64x1xi32>
    %148 = vector.broadcast %c7_i32_49 : i32 to vector<64x1xi32>
    %149 = arith.minsi %148, %147 : vector<64x1xi32>
    %150 = arith.addi %145, %149 : vector<64x1xi32>
    %151 = vector.broadcast %150 : vector<64x1xi32> to vector<64x64xi32>
    %152 = arith.cmpi eq, %30, %151 : vector<64x64xi32>
    %cst_50 = arith.constant 0.000000e+00 : f32
    %153 = vector.shape_cast %139 : vector<64x1xf32> to vector<64x1xf32>
    %154 = vector.broadcast %153 : vector<64x1xf32> to vector<64x64xf32>
    %155 = vector.broadcast %cst_50 : f32 to vector<64x64xf32>
    %156 = arith.select %152, %154, %155 : vector<64x64xi1>, vector<64x64xf32>
    %157 = arith.addf %125, %156 : vector<64x64xf32>
    %158 = arith.truncf %157 : vector<64x64xf32> to vector<64x64xbf16>
    %c0_51 = arith.constant 0 : index
    %c0_52 = arith.constant 0 : index
    %c0_53 = arith.constant 0 : index
    %159 = vector.load %arg3[%c0_51, %c0_52, %c0_53] : memref<1x64x2048xf32, #tpu.memory_space<vmem>>, vector<1x64x2048xf32>
    %160 = vector.shape_cast %159 : vector<1x64x2048xf32> to vector<64x2048xf32>
    %161 = arith.truncf %160 : vector<64x2048xf32> to vector<64x2048xbf16>
    %cst_54 = arith.constant dense<0.000000e+00> : vector<64x2048xf32>
    %162 = tpu.matmul %158, %161, %cst_54 {dimension_numbers = #tpu.dot_dimension_numbers<[1], [0], [0], [1], [0, 0, 1, 1], [], []>} : vector<64x64xbf16>, vector<64x2048xbf16>, vector<64x2048xf32> -> vector<64x2048xf32>
    %c0_55 = arith.constant 0 : index
    %c0_56 = arith.constant 0 : index
    %163 = vector.load %arg5[%c0_55, %c0_56] : memref<1x2048xf32, #tpu.memory_space<vmem>>, vector<1x2048xf32>
    %164 = arith.negf %163 : vector<1x2048xf32>
    %165 = math.exp %164 : vector<1x2048xf32>
    %cst_57 = arith.constant 1.000000e+00 : f32
    %166 = vector.broadcast %cst_57 : f32 to vector<1x2048xf32>
    %167 = arith.addf %166, %165 : vector<1x2048xf32>
    %168 = arith.divf %166, %167 : vector<1x2048xf32>
    %cst_58 = arith.constant 1.000000e+00 : f32
    %169 = vector.broadcast %cst_58 : f32 to vector<1x2048xf32>
    %170 = arith.subf %169, %168 : vector<1x2048xf32>
    %c0_59 = arith.constant 0 : index
    %c0_60 = arith.constant 0 : index
    %c0_61 = arith.constant 0 : index
    %171 = vector.load %arg4[%c0_59, %c0_60, %c0_61] : memref<1x64x2048xf32, #tpu.memory_space<vmem>>, vector<1x64x2048xf32>
    %172 = vector.shape_cast %171 : vector<1x64x2048xf32> to vector<64x2048xf32>
    %173 = vector.broadcast %170 : vector<1x2048xf32> to vector<64x2048xf32>
    %174 = arith.mulf %173, %172 : vector<64x2048xf32>
    %175 = vector.broadcast %168 : vector<1x2048xf32> to vector<64x2048xf32>
    %176 = arith.mulf %175, %162 : vector<64x2048xf32>
    %177 = arith.addf %174, %176 : vector<64x2048xf32>
    %c0_62 = arith.constant 0 : index
    %c0_63 = arith.constant 0 : index
    %c0_64 = arith.constant 0 : index
    %178 = vector.load %arg6[%c0_62, %c0_63, %c0_64] : memref<1x64x2048xf32, #tpu.memory_space<vmem>>, vector<1x64x2048xf32>
    %179 = vector.shape_cast %178 : vector<1x64x2048xf32> to vector<64x2048xf32>
    %180 = vector.shape_cast %177 : vector<64x2048xf32> to vector<1x64x2048xf32>
    tpu.vector_store %arg6[%c0_62, %c0_63, %c0_64], %180 {strides = array<i32>} : memref<1x64x2048xf32, #tpu.memory_space<vmem>>, vector<1x64x2048xf32>,
    return
  }
  func.func @transform_0(%arg0: i32, %arg1: i32) -> (i32, i32, i32) {
    %c0_i32 = arith.constant 0 : i32
    %c0_i32_0 = arith.constant 0 : i32
    return %arg0, %arg1, %c0_i32 : i32, i32, i32
  }
  func.func @transform_1(%arg0: i32, %arg1: i32) -> (i32, i32, i32) {
    %c0_i32 = arith.constant 0 : i32
    %c0_i32_0 = arith.constant 0 : i32
    %c0_i32_1 = arith.constant 0 : i32
    return %arg0, %c0_i32, %c0_i32_0 : i32, i32, i32
  }
  func.func @transform_2(%arg0: i32, %arg1: i32) -> (i32, i32, i32) {
    %c0_i32 = arith.constant 0 : i32
    %c0_i32_0 = arith.constant 0 : i32
    return %arg0, %arg1, %c0_i32 : i32, i32, i32
  }
  func.func @transform_3(%arg0: i32, %arg1: i32) -> (i32, i32) {
    %c0_i32 = arith.constant 0 : i32
    %c0_i32_0 = arith.constant 0 : i32
    %c0_i32_1 = arith.constant 0 : i32
    return %c0_i32, %c0_i32_0 : i32, i32
  }
  func.func @transform_4(%arg0: i32, %arg1: i32) -> (i32, i32, i32) {
    %c0_i32 = arith.constant 0 : i32
    %c0_i32_0 = arith.constant 0 : i32
    return %arg0, %arg1, %c0_i32 : i32, i32, i32
  }
}

</mosaic_0001>

<llo_original>
// kernel: warpnet_forward.1
$region0: #{warpnet_forward.1}
  #allocation0 [shape = 'u32[]', space=smem, size = 0x4, offset = 0x4, fixed_abs, tag = 'smem constant byte address 0x4 - core index']
  #allocation1 [shape = 'u32[72,128]{1,0:T(1,128)}', space=vmem, size = 0x9000, scoped, tag = 'internal scratch']
  %s0 = inlined_call_operand.vmem [shape: f32[2,64,2], index: 0, kind: input, shape index: {}]
  %s1 = inlined_call_operand.hbm [shape: f32[2,64,2048], index: 1, kind: input, shape index: {}]
  %s2 = inlined_call_operand.hbm [shape: f32[2,64,2048], index: 2, kind: input, shape index: {}]
  %s3 = inlined_call_operand.vmem [shape: f32[1,2048], index: 3, kind: input, shape index: {}]
  %s4 = inlined_call_operand.hbm [shape: f32[2,64,2048], index: 4, kind: output, shape index: {}]
  %s5 = sld [smem:[#allocation0]]
  $region57: #{warpnet_forward.1} parent=0
    _
  %s7 = ssub.s32 1, %s5
  %s8 = scalar_select 0, %s7, %s5
  $region1: #{warpnet_forward.1} parent=0
    #allocation2 [shape = 'u8[1048576]{0}', space=vmem, size = 0x100000, scoped, tag = 'input window, operand 1']
    #allocation3 [shape = 's32[2]{0}', space=sflag, size = 0x8, scoped, tag = 'scoped memory for warpnet_forward.1']
    #allocation4 [shape = 's32[2]{0}', space=sflag, size = 0x8, scoped, tag = 'scoped memory for warpnet_forward.1']
    #allocation5 [shape = 'u8[1048576]{0}', space=vmem, size = 0x100000, scoped, tag = 'input window, operand 2']
    #allocation6 [shape = 's32[2]{0}', space=sflag, size = 0x8, scoped, tag = 'scoped memory for warpnet_forward.1']
    #allocation7 [shape = 'u8[1048576]{0}', space=vmem, size = 0x100000, scoped, tag = 'output window, operand 0']
    %9 = vsyncpa [#allocation3], 0
    %s10 = scalar_lea.sflag [#allocation3], 1
    %11 = vsyncpa %s10, 0
    %12 = vsyncpa [#allocation6], 0
    %s13 = scalar_lea.sflag [#allocation6], 1
    %14 = vsyncpa %s13, 0
    %15 = vsyncpa [#allocation4], 0
    %s16 = scalar_lea.sflag [#allocation4], 1
    %17 = vsyncpa %s16, 0
    loop: start=0, step=1, limit=4
    $region2: #{warpnet_forward.1} parent=1 // loop_pre_header
      _
    $region3: #{warpnet_forward.1} parent=1 // loop_header
      %s19 = sphi 0, %s23
      %p20 = scmp.ge.s32.totalorder %s19, 4
      %s26 = sphi 0, %s38
      %s27 = sphi 0, %s34
      %s28 = sphi 0, %s26
      %s29 = sphi 0, %s27
      %s30 = sphi 0, %s28
      %s31 = sphi 0, %s29
      %s43 = sphi 0, %s45
      %s46 = sphi 0, %s43
      %s47 = sphi 0, %s46
      %s63 = sphi 0, %s47
      %s69 = sphi 0, %s71
      %s72 = sphi 0, %s69
      %s73 = sphi 0, %s72
      %s89 = sphi 0, %s73
      %s97 = sphi 0, %s99
      %s100 = sphi 0, %s97
      %s101 = sphi 0, %s100
      %s117 = sphi 0, %s101
      %s121 = sphi 0, %s121
      %s123 = sphi 0, %s121
      %s124 = sphi 0, %s123
      %s138 = sphi 0, %s124
      %s146 = sphi 0, %s148
      %s149 = sphi 0, %s146
      %s150 = sphi 0, %s149
      %s166 = sphi 0, %s150
    $region4: #{warpnet_forward.1} parent=1 // loop_header_branch
      %22 = sbr.rel (%p20) target = $region8
    $region5: #{warpnet_forward.1} parent=1 // loop_body
      %s24 = ssub.s32 %s19, 1
      %s25 = ssub.s32 %s19, 2
      %s32 = sadd.s32 1, %s27
      %p33 = scmp.ge.s32.totalorder %s32, 1
      %s34 = scalar_select %p33, 0, %s32
      %s35 = sadd.s32 1, %s26
      %s36 = scalar_select %p33, %s35, %s26
      %p37 = scmp.ge.s32.totalorder %s36, 2
      %s38 = scalar_select %p37, 0, %s36
      %s39 = ssub.s32 %s26, %s38
      %s40 = ssub.s32 %s27, %s34
      %s41 = sor.u32 %s39, %s40
      %p42 = scmp.eq.s32.totalorder %s41, 0
      %s44 = sadd.s32 %s43, 1
      %s45 = scalar_select %p42, %s43, %s44
      %p48 = pneg %p42
      %p49 = scmp.eq.s32.totalorder %s19, 1
      %p50 = por %p48, %p49
      %p51 = scmp.ne.s32.totalorder %s43, %s46
      %p52 = scmp.eq.s32.totalorder %s19, 0
      %p53 = por %p51, %p52
      %p54 = scmp.ne.s32.totalorder %s43, %s46
      %p55 = scmp.eq.s32.totalorder %s24, 1
      %p56 = por %p54, %p55
      %p57 = scmp.ne.s32.totalorder %s46, %s47
      %p58 = scmp.eq.s32.totalorder %s24, 0
      %p59 = por %p57, %p58
      %p60 = scmp.ne.s32.totalorder %s46, %s47
      %p61 = scmp.eq.s32.totalorder %s25, 1
      %p62 = por %p60, %p61
      %p64 = scmp.ne.s32.totalorder %s47, %s63
      %p65 = scmp.eq.s32.totalorder %s25, 0
      %p66 = por %p64, %p65
      %s67 = ssub.s32 %s26, %s38
      %p68 = scmp.eq.s32.totalorder %s67, 0
      %s70 = sadd.s32 %s69, 1
      %s71 = scalar_select %p68, %s69, %s70
      %p74 = pneg %p68
      %p75 = scmp.eq.s32.totalorder %s19, 1
      %p76 = por %p74, %p75
      %p77 = scmp.ne.s32.totalorder %s69, %s72
      %p78 = scmp.eq.s32.totalorder %s19, 0
      %p79 = por %p77, %p78
      %p80 = scmp.ne.s32.totalorder %s69, %s72
      %p81 = scmp.eq.s32.totalorder %s24, 1
      %p82 = por %p80, %p81
      %p83 = scmp.ne.s32.totalorder %s72, %s73
      %p84 = scmp.eq.s32.totalorder %s24, 0
      %p85 = por %p83, %p84
      %p86 = scmp.ne.s32.totalorder %s72, %s73
      %p87 = scmp.eq.s32.totalorder %s25, 1
      %p88 = por %p86, %p87
      %p90 = scmp.ne.s32.totalorder %s73, %s89
      %p91 = scmp.eq.s32.totalorder %s25, 0
      %p92 = por %p90, %p91
      %s93 = ssub.s32 %s26, %s38
      %s94 = ssub.s32 %s27, %s34
      %s95 = sor.u32 %s93, %s94
      %p96 = scmp.eq.s32.totalorder %s95, 0
      %s98 = sadd.s32 %s97, 1
      %s99 = scalar_select %p96, %s97, %s98
      %p102 = pneg %p96
      %p103 = scmp.eq.s32.totalorder %s19, 1
      %p104 = por %p102, %p103
      %p105 = scmp.ne.s32.totalorder %s97, %s100
      %p106 = scmp.eq.s32.totalorder %s19, 0
      %p107 = por %p105, %p106
      %p108 = scmp.ne.s32.totalorder %s97, %s100
      %p109 = scmp.eq.s32.totalorder %s24, 1
      %p110 = por %p108, %p109
      %p111 = scmp.ne.s32.totalorder %s100, %s101
      %p112 = scmp.eq.s32.totalorder %s24, 0
      %p113 = por %p111, %p112
      %p114 = scmp.ne.s32.totalorder %s100, %s101
      %p115 = scmp.eq.s32.totalorder %s25, 1
      %p116 = por %p114, %p115
      %p118 = scmp.ne.s32.totalorder %s101, %s117
      %p119 = scmp.eq.s32.totalorder %s25, 0
      %p120 = por %p118, %p119
      %s122 = sadd.s32 %s121, 1
      %p125 = scmp.eq.s32.totalorder %s19, 1
      %p126 = scmp.ne.s32.totalorder %s121, %s123
      %p127 = scmp.eq.s32.totalorder %s19, 0
      %p128 = por %p126, %p127
      %p129 = scmp.ne.s32.totalorder %s121, %s123
      %p130 = scmp.eq.s32.totalorder %s24, 1
      %p131 = por %p129, %p130
      %p132 = scmp.ne.s32.totalorder %s123, %s124
      %p133 = scmp.eq.s32.totalorder %s24, 0
      %p134 = por %p132, %p133
      %p135 = scmp.ne.s32.totalorder %s123, %s124
      %p136 = scmp.eq.s32.totalorder %s25, 1
      %p137 = por %p135, %p136
      %p139 = scmp.ne.s32.totalorder %s124, %s138
      %p140 = scmp.eq.s32.totalorder %s25, 0
      %p141 = por %p139, %p140
      %s142 = ssub.s32 %s26, %s38
      %s143 = ssub.s32 %s27, %s34
      %s144 = sor.u32 %s142, %s143
      %p145 = scmp.eq.s32.totalorder %s144, 0
      %s147 = sadd.s32 %s146, 1
      %s148 = scalar_select %p145, %s146, %s147
      %p151 = pneg %p145
      %p152 = scmp.eq.s32.totalorder %s19, 1
      %p153 = por %p151, %p152
      %p154 = scmp.ne.s32.totalorder %s146, %s149
      %p155 = scmp.eq.s32.totalorder %s19, 0
      %p156 = por %p154, %p155
      %p157 = scmp.ne.s32.totalorder %s146, %s149
      %p158 = scmp.eq.s32.totalorder %s24, 1
      %p159 = por %p157, %p158
      %p160 = scmp.ne.s32.totalorder %s149, %s150
      %p161 = scmp.eq.s32.totalorder %s24, 0
      %p162 = por %p160, %p161
      %p163 = scmp.ne.s32.totalorder %s149, %s150
      %p164 = scmp.eq.s32.totalorder %s25, 1
      %p165 = por %p163, %p164
      %p167 = scmp.ne.s32.totalorder %s150, %s166
      %p168 = scmp.eq.s32.totalorder %s25, 0
      %p169 = por %p167, %p168
      %p170 = scmp.le.s32.totalorder 1, %s19
      %p171 = scmp.lt.s32.totalorder %s19, 3
      %p172 = pnand %p170, %p171
      %p173 = pneg %p172
      // Predicated region
      $region9: #{warpnet_forward.1} parent=5 // pred_check
        _
      $region10: #{warpnet_forward.1} parent=5 // pred_check_branch
        %175 = sbr.rel (%p172) target = $region12
      $region11: #{warpnet_forward.1} parent=5 // pred_region
        %s176 = ssub.s32 %s19, 1
        // Predicated region
        $region13: #{warpnet_forward.1} parent=11 // pred_check
          %p177 = pneg %p134
        $region14: #{warpnet_forward.1} parent=11 // pred_check_branch
          %179 = sbr.rel (%p177) target = $region16
        $region15: #{warpnet_forward.1} parent=11 // pred_region
          _
        $region16: #{warpnet_forward.1} parent=11 // pred_fallthru
          _
      $region12: #{warpnet_forward.1} parent=5 // pred_fallthru
        _
      %p180 = scmp.lt.s32.totalorder %s19, 2
      // Predicated region
      $region17: #{warpnet_forward.1} parent=5 // pred_check
        %p181 = pneg %p180
      $region18: #{warpnet_forward.1} parent=5 // pred_check_branch
        %183 = sbr.rel (%p181) target = $region20
      $region19: #{warpnet_forward.1} parent=5 // pred_region
        // Predicated region
        $region21: #{warpnet_forward.1} parent=19 // pred_check
          %p184 = pneg %p53
        $region22: #{warpnet_forward.1} parent=19 // pred_check_branch
          %186 = sbr.rel (%p184) target = $region24
        $region23: #{warpnet_forward.1} parent=19 // pred_region
          %s187 = smul.u32 8, %s27
          %p188 = scmp.lt.s32.totalorder %s26, 1
          %s189 = scalar_select %p188, %s26, 1
          %p190 = scmp.lt.s32.totalorder %s187, 7
          %s191 = scalar_select %p190, %s187, 7
          %s192 = smul.addr %s189, 8
          %s193 = sadd.s32 %s191, %s192
          %s194 = smul.addr %s193, 8
          %s195 = scalar_lea.vmem %s0, %s194
          %s196 = smul.u32 8, %s27
        $region24: #{warpnet_forward.1} parent=19 // pred_fallthru
          _
        // Predicated region
        $region25: #{warpnet_forward.1} parent=19 // pred_check
          %p197 = pneg %p79
        $region26: #{warpnet_forward.1} parent=19 // pred_check_branch
          %199 = sbr.rel (%p197) target = $region28
        $region27: #{warpnet_forward.1} parent=19 // pred_region
          %s200 = sand.u32 %s69, 1
          %s201 = scalar_lea.sflag [#allocation3], %s200
          %s202 = sand.u32 %s69, 1
          %s203 = smul.addr %s202, 1024
          %s204 = scalar_lea.vmem [#allocation2], %s203
          %206 = vsyncadd %s201, 0
          %s207 = smul.addr %s26, 128
          %s208 = smul.addr %s207, 8
          %s209 = scalar_lea.hbm %s1, %s208
          %s210 = sshll.u32 %s209, 4
          %s211 = int_to_ptr.hbm [resolvable:$true] %s210
          %s212 = sshll.u32 %s204, 4
          %s213 = int_to_ptr.vmem [resolvable:$true] %s212
          %218 = dma.hbm_to_vmem [thread:$0]  %s211, 16384, %s213, %s201, 2048, 2048, 128
        $region28: #{warpnet_forward.1} parent=19 // pred_fallthru
          _
        // Predicated region
        $region29: #{warpnet_forward.1} parent=19 // pred_check
          %p219 = pneg %p107
        $region30: #{warpnet_forward.1} parent=19 // pred_check_branch
          %221 = sbr.rel (%p219) target = $region32
        $region31: #{warpnet_forward.1} parent=19 // pred_region
          %s222 = sand.u32 %s97, 1
          %s223 = scalar_lea.sflag [#allocation6], %s222
          %s224 = sand.u32 %s97, 1
          %s225 = smul.addr %s224, 1024
          %s226 = scalar_lea.vmem [#allocation5], %s225
          %s227 = smul.u32 8, %s27
          %229 = vsyncadd %s223, 0
          %s230 = smul.addr %s227, 16
          %s231 = smul.addr %s26, 128
          %s232 = sadd.s32 %s230, %s231
          %s233 = smul.addr %s232, 8
          %s234 = scalar_lea.hbm %s2, %s233
          %s235 = sshll.u32 %s234, 4
          %s236 = int_to_ptr.hbm [resolvable:$true] %s235
          %s237 = sshll.u32 %s226, 4
          %s238 = int_to_ptr.vmem [resolvable:$true] %s237
          %243 = dma.hbm_to_vmem [thread:$0]  %s236, 16384, %s238, %s223, 2048, 2048, 128
        $region32: #{warpnet_forward.1} parent=19 // pred_fallthru
          _
      $region20: #{warpnet_forward.1} parent=5 // pred_fallthru
        _
      %p244 = scmp.le.s32.totalorder 1, %s19
      %p245 = scmp.lt.s32.totalorder %s19, 3
      %p246 = pnand %p244, %p245
      %p247 = pneg %p246
      // Predicated region
      $region33: #{warpnet_forward.1} parent=5 // pred_check
        _
      $region34: #{warpnet_forward.1} parent=5 // pred_check_branch
        %249 = sbr.rel (%p246) target = $region36
      $region35: #{warpnet_forward.1} parent=5 // pred_region
        %s250 = ssub.s32 %s19, 1
        %s251 = sand.u32 %s72, 1
        %s252 = scalar_lea.sflag [#allocation3], %s251
        %s253 = sand.u32 %s72, 1
        %s254 = smul.addr %s253, 1024
        %s255 = scalar_lea.vmem [#allocation2], %s254
        // Predicated region
        $region37: #{warpnet_forward.1} parent=35 // pred_check
          %p256 = pneg %p85
        $region38: #{warpnet_forward.1} parent=35 // pred_check_branch
          %258 = sbr.rel (%p256) target = $region40
        $region39: #{warpnet_forward.1} parent=35 // pred_region
          %260 = dma.done %s252, 16384
        $region40: #{warpnet_forward.1} parent=35 // pred_fallthru
          _
        %s261 = sand.u32 %s100, 1
        %s262 = scalar_lea.sflag [#allocation6], %s261
        %s263 = sand.u32 %s100, 1
        %s264 = smul.addr %s263, 1024
        %s265 = scalar_lea.vmem [#allocation5], %s264
        // Predicated region
        $region41: #{warpnet_forward.1} parent=35 // pred_check
          %p266 = pneg %p113
        $region42: #{warpnet_forward.1} parent=35 // pred_check_branch
          %268 = sbr.rel (%p266) target = $region44
        $region43: #{warpnet_forward.1} parent=35 // pred_region
          %270 = dma.done %s262, 16384
        $region44: #{warpnet_forward.1} parent=35 // pred_fallthru
          _
        %s271 = smul.u32 8, %s29
        %p272 = scmp.lt.s32.totalorder %s28, 1
        %s273 = scalar_select %p272, %s28, 1
        %p274 = scmp.lt.s32.totalorder %s271, 7
        %s275 = scalar_select %p274, %s271, 7
        %s276 = smul.addr %s273, 8
        %s277 = sadd.s32 %s275, %s276
        %s278 = smul.addr %s277, 8
        %s279 = scalar_lea.vmem %s0, %s278
        %p280 = pneg %p59
        %p281 = pneg %p56
        %s282 = sand.u32 %s72, 1
        %s283 = scalar_lea.sflag [#allocation3], %s282
        %s284 = sand.u32 %s72, 1
        %s285 = smul.addr %s284, 1024
        %s286 = scalar_lea.vmem [#allocation2], %s285
        %p287 = pneg %p85
        %p288 = pneg %p82
        %s289 = sand.u32 %s100, 1
        %s290 = scalar_lea.sflag [#allocation6], %s289
        %s291 = sand.u32 %s100, 1
        %s292 = smul.addr %s291, 1024
        %s293 = scalar_lea.vmem [#allocation5], %s292
        %p294 = pneg %p113
        %p295 = pneg %p110
        %p296 = pneg %p134
        %p297 = pneg %p131
        %p298 = pneg %p162
        %p299 = pneg %p159
        %s300 = sand.u32 %s149, 1
        %s301 = scalar_lea.sflag [#allocation4], %s300
        %s302 = sand.u32 %s149, 1
        %s303 = smul.addr %s302, 1024
        %s304 = scalar_lea.vmem [#allocation7], %s303
        %s305 = smul.u32 8, %s29
        %p306 = scmp.lt.s32.totalorder %s28, 1
        %s307 = scalar_select %p306, %s28, 1
        %p308 = scmp.lt.s32.totalorder %s305, 7
        %s309 = scalar_select %p308, %s305, 7
        %s310 = smul.addr %s307, 8
        %s311 = sadd.s32 %s309, %s310
        %s312 = smul.addr %s311, 8
        %s313 = scalar_lea.vmem %s0, %s312
        %s314 = smul.u32 8, %s29
        %s315 = smul.u32 8, %s29
        %s316 = smul.u32 8, %s29
        %v318 = vld [vmem:[%s313] sm:$0xff]
        %v319 = vld [vmem:[%s313 + $0x8] sm:$0xff]
        %v320 = vld [vmem:[%s313 + $0x10] sm:$0xff]
        %v321 = vld [vmem:[%s313 + $0x18] sm:$0xff]
        %v322 = vld [vmem:[%s313 + $0x20] sm:$0xff]
        %v323 = vld [vmem:[%s313 + $0x28] sm:$0xff]
        %v324 = vld [vmem:[%s313 + $0x30] sm:$0xff]
        %v325 = vld [vmem:[%s313 + $0x38] sm:$0xff]
        %v326 = vadd.f32 %v318, 1.0
        %v327 = vadd.f32 %v319, 1.0
        %v328 = vadd.f32 %v320, 1.0
        %v329 = vadd.f32 %v321, 1.0
        %v330 = vadd.f32 %v322, 1.0
        %v331 = vadd.f32 %v323, 1.0
        %v332 = vadd.f32 %v324, 1.0
        %v333 = vadd.f32 %v325, 1.0
        %v334 = vmul.f32 %v326, 4.0
        %v335 = vmul.f32 %v327, 4.0
        %v336 = vmul.f32 %v328, 4.0
        %v337 = vmul.f32 %v329, 4.0
        %v338 = vmul.f32 %v330, 4.0
        %v339 = vmul.f32 %v331, 4.0
        %v340 = vmul.f32 %v332, 4.0
        %v341 = vmul.f32 %v333, 4.0
        %v342 = vsub.f32 %v334, 0.5
        %v343 = vsub.f32 %v335, 0.5
        %v344 = vsub.f32 %v336, 0.5
        %v345 = vsub.f32 %v337, 0.5
        %v346 = vsub.f32 %v338, 0.5
        %v347 = vsub.f32 %v339, 0.5
        %v348 = vsub.f32 %v340, 0.5
        %v349 = vsub.f32 %v341, 0.5
        %v350 = vfloor.f32 %v342
        %v351 = vfloor.f32 %v343
        %v352 = vfloor.f32 %v344
        %v353 = vfloor.f32 %v345
        %v354 = vfloor.f32 %v346
        %v355 = vfloor.f32 %v347
        %v356 = vfloor.f32 %v348
        %v357 = vfloor.f32 %v349
        %v358 = vsub.f32 %v342, %v350
        %v359 = vsub.f32 %v343, %v351
        %v360 = vsub.f32 %v344, %v352
        %v361 = vsub.f32 %v345, %v353
        %v362 = vsub.f32 %v346, %v354
        %v363 = vsub.f32 %v347, %v355
        %v364 = vsub.f32 %v348, %v356
        %v365 = vsub.f32 %v349, %v357
        %v366 = vsub.f32 1.0, %v358
        %v367 = vsub.f32 1.0, %v359
        %v368 = vsub.f32 1.0, %v360
        %v369 = vsub.f32 1.0, %v361
        %v370 = vsub.f32 1.0, %v362
        %v371 = vsub.f32 1.0, %v363
        %v372 = vsub.f32 1.0, %v364
        %v373 = vsub.f32 1.0, %v365
        %v374 = vcvt.f32.s32.to.zero.pseudo %v350
        %v375 = vcvt.f32.s32.to.zero.pseudo %v351
        %v376 = vcvt.f32.s32.to.zero.pseudo %v352
        %v377 = vcvt.f32.s32.to.zero.pseudo %v353
        %v378 = vcvt.f32.s32.to.zero.pseudo %v354
        %v379 = vcvt.f32.s32.to.zero.pseudo %v355
        %v380 = vcvt.f32.s32.to.zero.pseudo %v356
        %v381 = vcvt.f32.s32.to.zero.pseudo %v357
        %v382 = vadd.s32 %v374, 1
        %v383 = vadd.s32 %v375, 1
        %v384 = vadd.s32 %v376, 1
        %v385 = vadd.s32 %v377, 1
        %v386 = vadd.s32 %v378, 1
        %v387 = vadd.s32 %v379, 1
        %v388 = vadd.s32 %v380, 1
        %v389 = vadd.s32 %v381, 1
        %v390 = vlaneseq
        %v391 = vand.u32 %v390, 127
        %400 = vrot.lane.b32.xlu0 %v366, 127
        %v401 = vpop.permute.xlu0 %400
        %402 = vrot.lane.b32.xlu0 %v367, 127
        %v403 = vpop.permute.xlu0 %402
        %404 = vrot.lane.b32.xlu0 %v368, 127
        %v405 = vpop.permute.xlu0 %404
        %406 = vrot.lane.b32.xlu0 %v369, 127
        %v407 = vpop.permute.xlu0 %406
        %408 = vrot.lane.b32.xlu0 %v370, 127
        %v409 = vpop.permute.xlu0 %408
        %410 = vrot.lane.b32.xlu0 %v371, 127
        %v411 = vpop.permute.xlu0 %410
        %412 = vrot.lane.b32.xlu0 %v372, 127
        %v413 = vpop.permute.xlu0 %412
        %414 = vrot.lane.b32.xlu0 %v373, 127
        %v415 = vpop.permute.xlu0 %414
        %v424 = vmul.f32 %v366, %v401
        %v425 = vmul.f32 %v367, %v403
        %v426 = vmul.f32 %v368, %v405
        %v427 = vmul.f32 %v369, %v407
        %v428 = vmul.f32 %v370, %v409
        %v429 = vmul.f32 %v371, %v411
        %v430 = vmul.f32 %v372, %v413
        %v431 = vmul.f32 %v373, %v415
        %vm432 = vcmp.ge.s32.totalorder %v374, 0
        %vm433 = vcmp.ge.s32.totalorder %v375, 0
        %vm434 = vcmp.ge.s32.totalorder %v376, 0
        %vm435 = vcmp.ge.s32.totalorder %v377, 0
        %vm436 = vcmp.ge.s32.totalorder %v378, 0
        %vm437 = vcmp.ge.s32.totalorder %v379, 0
        %vm438 = vcmp.ge.s32.totalorder %v380, 0
        %vm439 = vcmp.ge.s32.totalorder %v381, 0
        %vm440 = vcmp.lt.s32.totalorder %v374, 8
        %vm441 = vcmp.lt.s32.totalorder %v375, 8
        %vm442 = vcmp.lt.s32.totalorder %v376, 8
        %vm443 = vcmp.lt.s32.totalorder %v377, 8
        %vm444 = vcmp.lt.s32.totalorder %v378, 8
        %vm445 = vcmp.lt.s32.totalorder %v379, 8
        %vm446 = vcmp.lt.s32.totalorder %v380, 8
        %vm447 = vcmp.lt.s32.totalorder %v381, 8
        %vm448 = vmand %vm432, %vm440
        %vm449 = vmand %vm433, %vm441
        %vm450 = vmand %vm434, %vm442
        %vm451 = vmand %vm435, %vm443
        %vm452 = vmand %vm436, %vm444
        %vm453 = vmand %vm437, %vm445
        %vm454 = vmand %vm438, %vm446
        %vm455 = vmand %vm439, %vm447
        %v456 = vsel %vm432, 1, 0
        %v457 = vsel %vm433, 1, 0
        %v458 = vsel %vm434, 1, 0
        %v459 = vsel %vm435, 1, 0
        %v460 = vsel %vm436, 1, 0
        %v461 = vsel %vm437, 1, 0
        %v462 = vsel %vm438, 1, 0
        %v463 = vsel %vm439, 1, 0
        %464 = vrot.lane.b32.xlu0 %v456, 127
        %v465 = vpop.permute.xlu0 %464
        %466 = vrot.lane.b32.xlu0 %v457, 127
        %v467 = vpop.permute.xlu0 %466
        %468 = vrot.lane.b32.xlu0 %v458, 127
        %v469 = vpop.permute.xlu0 %468
        %470 = vrot.lane.b32.xlu0 %v459, 127
        %v471 = vpop.permute.xlu0 %470
        %472 = vrot.lane.b32.xlu0 %v460, 127
        %v473 = vpop.permute.xlu0 %472
        %474 = vrot.lane.b32.xlu0 %v461, 127
        %v475 = vpop.permute.xlu0 %474
        %476 = vrot.lane.b32.xlu0 %v462, 127
        %v477 = vpop.permute.xlu0 %476
        %478 = vrot.lane.b32.xlu0 %v463, 127
        %v479 = vpop.permute.xlu0 %478
        %vm480 = vcmp.ne.s32.totalorder %v465, 0
        %vm481 = vcmp.ne.s32.totalorder %v467, 0
        %vm482 = vcmp.ne.s32.totalorder %v469, 0
        %vm483 = vcmp.ne.s32.totalorder %v471, 0
        %vm484 = vcmp.ne.s32.totalorder %v473, 0
        %vm485 = vcmp.ne.s32.totalorder %v475, 0
        %vm486 = vcmp.ne.s32.totalorder %v477, 0
        %vm487 = vcmp.ne.s32.totalorder %v479, 0
        %vm488 = vmand %vm448, %vm480
        %vm489 = vmand %vm449, %vm481
        %vm490 = vmand %vm450, %vm482
        %vm491 = vmand %vm451, %vm483
        %vm492 = vmand %vm452, %vm484
        %vm493 = vmand %vm453, %vm485
        %vm494 = vmand %vm454, %vm486
        %vm495 = vmand %vm455, %vm487
        %v496 = vsel %vm440, 1, 0
        %v497 = vsel %vm441, 1, 0
        %v498 = vsel %vm442, 1, 0
        %v499 = vsel %vm443, 1, 0
        %v500 = vsel %vm444, 1, 0
        %v501 = vsel %vm445, 1, 0
        %v502 = vsel %vm446, 1, 0
        %v503 = vsel %vm447, 1, 0
        %504 = vrot.lane.b32.xlu0 %v496, 127
        %v505 = vpop.permute.xlu0 %504
        %506 = vrot.lane.b32.xlu0 %v497, 127
        %v507 = vpop.permute.xlu0 %506
        %508 = vrot.lane.b32.xlu0 %v498, 127
        %v509 = vpop.permute.xlu0 %508
        %510 = vrot.lane.b32.xlu0 %v499, 127
        %v511 = vpop.permute.xlu0 %510
        %512 = vrot.lane.b32.xlu0 %v500, 127
        %v513 = vpop.permute.xlu0 %512
        %514 = vrot.lane.b32.xlu0 %v501, 127
        %v515 = vpop.permute.xlu0 %514
        %516 = vrot.lane.b32.xlu0 %v502, 127
        %v517 = vpop.permute.xlu0 %516
        %518 = vrot.lane.b32.xlu0 %v503, 127
        %v519 = vpop.permute.xlu0 %518
        %vm520 = vcmp.ne.s32.totalorder %v505, 0
        %vm521 = vcmp.ne.s32.totalorder %v507, 0
        %vm522 = vcmp.ne.s32.totalorder %v509, 0
        %vm523 = vcmp.ne.s32.totalorder %v511, 0
        %vm524 = vcmp.ne.s32.totalorder %v513, 0
        %vm525 = vcmp.ne.s32.totalorder %v515, 0
        %vm526 = vcmp.ne.s32.totalorder %v517, 0
        %vm527 = vcmp.ne.s32.totalorder %v519, 0
        %vm528 = vmand %vm488, %vm520
        %vm529 = vmand %vm489, %vm521
        %vm530 = vmand %vm490, %vm522
        %vm531 = vmand %vm491, %vm523
        %vm532 = vmand %vm492, %vm524
        %vm533 = vmand %vm493, %vm525
        %vm534 = vmand %vm494, %vm526
        %vm535 = vmand %vm495, %vm527
        %v536 = vsel %vm528, %v424, 0.0
        %v537 = vsel %vm529, %v425, 0.0
        %v538 = vsel %vm530, %v426, 0.0
        %v539 = vsel %vm531, %v427, 0.0
        %v540 = vsel %vm532, %v428, 0.0
        %v541 = vsel %vm533, %v429, 0.0
        %v542 = vsel %vm534, %v430, 0.0
        %v543 = vsel %vm535, %v431, 0.0
        %vm544 = vcmp.gt.s32.totalorder %v374, 0
        %v545 = vsel %vm544, %v374, 0
        %vm546 = vcmp.gt.s32.totalorder %v375, 0
        %v547 = vsel %vm546, %v375, 0
        %vm548 = vcmp.gt.s32.totalorder %v376, 0
        %v549 = vsel %vm548, %v376, 0
        %vm550 = vcmp.gt.s32.totalorder %v377, 0
        %v551 = vsel %vm550, %v377, 0
        %vm552 = vcmp.gt.s32.totalorder %v378, 0
        %v553 = vsel %vm552, %v378, 0
        %vm554 = vcmp.gt.s32.totalorder %v379, 0
        %v555 = vsel %vm554, %v379, 0
        %vm556 = vcmp.gt.s32.totalorder %v380, 0
        %v557 = vsel %vm556, %v380, 0
        %vm558 = vcmp.gt.s32.totalorder %v381, 0
        %v559 = vsel %vm558, %v381, 0
        %vm560 = vcmp.lt.s32.totalorder %v545, 7
        %v561 = vsel %vm560, %v545, 7
        %vm562 = vcmp.lt.s32.totalorder %v547, 7
        %v563 = vsel %vm562, %v547, 7
        %vm564 = vcmp.lt.s32.totalorder %v549, 7
        %v565 = vsel %vm564, %v549, 7
        %vm566 = vcmp.lt.s32.totalorder %v551, 7
        %v567 = vsel %vm566, %v551, 7
        %vm568 = vcmp.lt.s32.totalorder %v553, 7
        %v569 = vsel %vm568, %v553, 7
        %vm570 = vcmp.lt.s32.totalorder %v555, 7
        %v571 = vsel %vm570, %v555, 7
        %vm572 = vcmp.lt.s32.totalorder %v557, 7
        %v573 = vsel %vm572, %v557, 7
        %vm574 = vcmp.lt.s32.totalorder %v559, 7
        %v575 = vsel %vm574, %v559, 7
        %v576 = vmul.u32 %v561, 8
        %v577 = vmul.u32 %v563, 8
        %v578 = vmul.u32 %v565, 8
        %v579 = vmul.u32 %v567, 8
        %v580 = vmul.u32 %v569, 8
        %v581 = vmul.u32 %v571, 8
        %v582 = vmul.u32 %v573, 8
        %v583 = vmul.u32 %v575, 8
        %584 = vrot.lane.b32.xlu0 %v561, 1
        %v585 = vpop.permute.xlu0 %584
        %586 = vrot.lane.b32.xlu0 %v563, 1
        %v587 = vpop.permute.xlu0 %586
        %588 = vrot.lane.b32.xlu0 %v565, 1
        %v589 = vpop.permute.xlu0 %588
        %590 = vrot.lane.b32.xlu0 %v567, 1
        %v591 = vpop.permute.xlu0 %590
        %592 = vrot.lane.b32.xlu0 %v569, 1
        %v593 = vpop.permute.xlu0 %592
        %594 = vrot.lane.b32.xlu0 %v571, 1
        %v595 = vpop.permute.xlu0 %594
        %596 = vrot.lane.b32.xlu0 %v573, 1
        %v597 = vpop.permute.xlu0 %596
        %598 = vrot.lane.b32.xlu0 %v575, 1
        %v599 = vpop.permute.xlu0 %598
        %v600 = vadd.s32 %v576, %v585
        %v601 = vadd.s32 %v577, %v587
        %v602 = vadd.s32 %v578, %v589
        %v603 = vadd.s32 %v579, %v591
        %v604 = vadd.s32 %v580, %v593
        %v605 = vadd.s32 %v581, %v595
        %v606 = vadd.s32 %v582, %v597
        %v607 = vadd.s32 %v583, %v599
        %608 = vset.pattern.permute.xlu0 1
        %609 = vperm.xlu0 %608, %v600
        %v610 = vpop.permute.xlu0 %609
        %611 = vset.pattern.permute.xlu0 1
        %612 = vperm.xlu0 %611, %v601
        %v613 = vpop.permute.xlu0 %612
        %614 = vset.pattern.permute.xlu0 1
        %615 = vperm.xlu0 %614, %v602
        %v616 = vpop.permute.xlu0 %615
        %617 = vset.pattern.permute.xlu0 1
        %618 = vperm.xlu0 %617, %v603
        %v619 = vpop.permute.xlu0 %618
        %620 = vset.pattern.permute.xlu0 1
        %621 = vperm.xlu0 %620, %v604
        %v622 = vpop.permute.xlu0 %621
        %623 = vset.pattern.permute.xlu0 1
        %624 = vperm.xlu0 %623, %v605
        %v625 = vpop.permute.xlu0 %624
        %626 = vset.pattern.permute.xlu0 1
        %627 = vperm.xlu0 %626, %v606
        %v628 = vpop.permute.xlu0 %627
        %629 = vset.pattern.permute.xlu0 1
        %630 = vperm.xlu0 %629, %v607
        %v631 = vpop.permute.xlu0 %630
        %vm632 = vcmp.eq.s32.totalorder %v391, %v610
        %vm633 = vcmp.eq.s32.totalorder %v391, %v613
        %vm634 = vcmp.eq.s32.totalorder %v391, %v616
        %vm635 = vcmp.eq.s32.totalorder %v391, %v619
        %vm636 = vcmp.eq.s32.totalorder %v391, %v622
        %vm637 = vcmp.eq.s32.totalorder %v391, %v625
        %vm638 = vcmp.eq.s32.totalorder %v391, %v628
        %vm639 = vcmp.eq.s32.totalorder %v391, %v631
        %641 = vset.pattern.permute.xlu0 0
        %642 = vperm.xlu0 %641, %v536
        %v643 = vpop.permute.xlu0 %642
        %646 = vset.pattern.permute.xlu0 0
        %647 = vperm.xlu0 %646, %v537
        %v648 = vpop.permute.xlu0 %647
        %651 = vset.pattern.permute.xlu0 0
        %652 = vperm.xlu0 %651, %v538
        %v653 = vpop.permute.xlu0 %652
        %656 = vset.pattern.permute.xlu0 0
        %657 = vperm.xlu0 %656, %v539
        %v658 = vpop.permute.xlu0 %657
        %661 = vset.pattern.permute.xlu0 0
        %662 = vperm.xlu0 %661, %v540
        %v663 = vpop.permute.xlu0 %662
        %666 = vset.pattern.permute.xlu0 0
        %667 = vperm.xlu0 %666, %v541
        %v668 = vpop.permute.xlu0 %667
        %671 = vset.pattern.permute.xlu0 0
        %672 = vperm.xlu0 %671, %v542
        %v673 = vpop.permute.xlu0 %672
        %676 = vset.pattern.permute.xlu0 0
        %677 = vperm.xlu0 %676, %v543
        %v678 = vpop.permute.xlu0 %677
        %v680 = vsel %vm632, %v643, 0.0
        %v681 = vsel %vm633, %v648, 0.0
        %v682 = vsel %vm634, %v653, 0.0
        %v683 = vsel %vm635, %v658, 0.0
        %v684 = vsel %vm636, %v663, 0.0
        %v685 = vsel %vm637, %v668, 0.0
        %v686 = vsel %vm638, %v673, 0.0
        %v687 = vsel %vm639, %v678, 0.0
        %v688 = vmul.f32 %v358, %v401
        %v689 = vmul.f32 %v359, %v403
        %v690 = vmul.f32 %v360, %v405
        %v691 = vmul.f32 %v361, %v407
        %v692 = vmul.f32 %v362, %v409
        %v693 = vmul.f32 %v363, %v411
        %v694 = vmul.f32 %v364, %v413
        %v695 = vmul.f32 %v365, %v415
        %vm696 = vcmp.ge.s32.totalorder %v382, 0
        %vm697 = vcmp.ge.s32.totalorder %v383, 0
        %vm698 = vcmp.ge.s32.totalorder %v384, 0
        %vm699 = vcmp.ge.s32.totalorder %v385, 0
        %vm700 = vcmp.ge.s32.totalorder %v386, 0
        %vm701 = vcmp.ge.s32.totalorder %v387, 0
        %vm702 = vcmp.ge.s32.totalorder %v388, 0
        %vm703 = vcmp.ge.s32.totalorder %v389, 0
        %vm704 = vcmp.lt.s32.totalorder %v382, 8
        %vm705 = vcmp.lt.s32.totalorder %v383, 8
        %vm706 = vcmp.lt.s32.totalorder %v384, 8
        %vm707 = vcmp.lt.s32.totalorder %v385, 8
        %vm708 = vcmp.lt.s32.totalorder %v386, 8
        %vm709 = vcmp.lt.s32.totalorder %v387, 8
        %vm710 = vcmp.lt.s32.totalorder %v388, 8
        %vm711 = vcmp.lt.s32.totalorder %v389, 8
        %vm712 = vmand %vm696, %vm704
        %vm713 = vmand %vm697, %vm705
        %vm714 = vmand %vm698, %vm706
        %vm715 = vmand %vm699, %vm707
        %vm716 = vmand %vm700, %vm708
        %vm717 = vmand %vm701, %vm709
        %vm718 = vmand %vm702, %vm710
        %vm719 = vmand %vm703, %vm711
        %vm720 = vmand %vm712, %vm480
        %vm721 = vmand %vm713, %vm481
        %vm722 = vmand %vm714, %vm482
        %vm723 = vmand %vm715, %vm483
        %vm724 = vmand %vm716, %vm484
        %vm725 = vmand %vm717, %vm485
        %vm726 = vmand %vm718, %vm486
        %vm727 = vmand %vm719, %vm487
        %vm728 = vmand %vm720, %vm520
        %vm729 = vmand %vm721, %vm521
        %vm730 = vmand %vm722, %vm522
        %vm731 = vmand %vm723, %vm523
        %vm732 = vmand %vm724, %vm524
        %vm733 = vmand %vm725, %vm525
        %vm734 = vmand %vm726, %vm526
        %vm735 = vmand %vm727, %vm527
        %v736 = vsel %vm728, %v688, 0.0
        %v737 = vsel %vm729, %v689, 0.0
        %v738 = vsel %vm730, %v690, 0.0
        %v739 = vsel %vm731, %v691, 0.0
        %v740 = vsel %vm732, %v692, 0.0
        %v741 = vsel %vm733, %v693, 0.0
        %v742 = vsel %vm734, %v694, 0.0
        %v743 = vsel %vm735, %v695, 0.0
        %vm744 = vcmp.gt.s32.totalorder %v382, 0
        %v745 = vsel %vm744, %v382, 0
        %vm746 = vcmp.gt.s32.totalorder %v383, 0
        %v747 = vsel %vm746, %v383, 0
        %vm748 = vcmp.gt.s32.totalorder %v384, 0
        %v749 = vsel %vm748, %v384, 0
        %vm750 = vcmp.gt.s32.totalorder %v385, 0
        %v751 = vsel %vm750, %v385, 0
        %vm752 = vcmp.gt.s32.totalorder %v386, 0
        %v753 = vsel %vm752, %v386, 0
        %vm754 = vcmp.gt.s32.totalorder %v387, 0
        %v755 = vsel %vm754, %v387, 0
        %vm756 = vcmp.gt.s32.totalorder %v388, 0
        %v757 = vsel %vm756, %v388, 0
        %vm758 = vcmp.gt.s32.totalorder %v389, 0
        %v759 = vsel %vm758, %v389, 0
        %vm760 = vcmp.lt.s32.totalorder %v745, 7
        %v761 = vsel %vm760, %v745, 7
        %vm762 = vcmp.lt.s32.totalorder %v747, 7
        %v763 = vsel %vm762, %v747, 7
        %vm764 = vcmp.lt.s32.totalorder %v749, 7
        %v765 = vsel %vm764, %v749, 7
        %vm766 = vcmp.lt.s32.totalorder %v751, 7
        %v767 = vsel %vm766, %v751, 7
        %vm768 = vcmp.lt.s32.totalorder %v753, 7
        %v769 = vsel %vm768, %v753, 7
        %vm770 = vcmp.lt.s32.totalorder %v755, 7
        %v771 = vsel %vm770, %v755, 7
        %vm772 = vcmp.lt.s32.totalorder %v757, 7
        %v773 = vsel %vm772, %v757, 7
        %vm774 = vcmp.lt.s32.totalorder %v759, 7
        %v775 = vsel %vm774, %v759, 7
        %776 = vrot.lane.b32.xlu0 %v761, 1
        %v777 = vpop.permute.xlu0 %776
        %778 = vrot.lane.b32.xlu0 %v763, 1
        %v779 = vpop.permute.xlu0 %778
        %780 = vrot.lane.b32.xlu0 %v765, 1
        %v781 = vpop.permute.xlu0 %780
        %782 = vrot.lane.b32.xlu0 %v767, 1
        %v783 = vpop.permute.xlu0 %782
        %784 = vrot.lane.b32.xlu0 %v769, 1
        %v785 = vpop.permute.xlu0 %784
        %786 = vrot.lane.b32.xlu0 %v771, 1
        %v787 = vpop.permute.xlu0 %786
        %788 = vrot.lane.b32.xlu0 %v773, 1
        %v789 = vpop.permute.xlu0 %788
        %790 = vrot.lane.b32.xlu0 %v775, 1
        %v791 = vpop.permute.xlu0 %790
        %v792 = vadd.s32 %v576, %v777
        %v793 = vadd.s32 %v577, %v779
        %v794 = vadd.s32 %v578, %v781
        %v795 = vadd.s32 %v579, %v783
        %v796 = vadd.s32 %v580, %v785
        %v797 = vadd.s32 %v581, %v787
        %v798 = vadd.s32 %v582, %v789
        %v799 = vadd.s32 %v583, %v791
        %800 = vset.pattern.permute.xlu0 1
        %801 = vperm.xlu0 %800, %v792
        %v802 = vpop.permute.xlu0 %801
        %803 = vset.pattern.permute.xlu0 1
        %804 = vperm.xlu0 %803, %v793
        %v805 = vpop.permute.xlu0 %804
        %806 = vset.pattern.permute.xlu0 1
        %807 = vperm.xlu0 %806, %v794
        %v808 = vpop.permute.xlu0 %807
        %809 = vset.pattern.permute.xlu0 1
        %810 = vperm.xlu0 %809, %v795
        %v811 = vpop.permute.xlu0 %810
        %812 = vset.pattern.permute.xlu0 1
        %813 = vperm.xlu0 %812, %v796
        %v814 = vpop.permute.xlu0 %813
        %815 = vset.pattern.permute.xlu0 1
        %816 = vperm.xlu0 %815, %v797
        %v817 = vpop.permute.xlu0 %816
        %818 = vset.pattern.permute.xlu0 1
        %819 = vperm.xlu0 %818, %v798
        %v820 = vpop.permute.xlu0 %819
        %821 = vset.pattern.permute.xlu0 1
        %822 = vperm.xlu0 %821, %v799
        %v823 = vpop.permute.xlu0 %822
        %vm824 = vcmp.eq.s32.totalorder %v391, %v802
        %vm825 = vcmp.eq.s32.totalorder %v391, %v805
        %vm826 = vcmp.eq.s32.totalorder %v391, %v808
        %vm827 = vcmp.eq.s32.totalorder %v391, %v811
        %vm828 = vcmp.eq.s32.totalorder %v391, %v814
        %vm829 = vcmp.eq.s32.totalorder %v391, %v817
        %vm830 = vcmp.eq.s32.totalorder %v391, %v820
        %vm831 = vcmp.eq.s32.totalorder %v391, %v823
        %833 = vset.pattern.permute.xlu0 0
        %834 = vperm.xlu0 %833, %v736
        %v835 = vpop.permute.xlu0 %834
        %838 = vset.pattern.permute.xlu0 0
        %839 = vperm.xlu0 %838, %v737
        %v840 = vpop.permute.xlu0 %839
        %843 = vset.pattern.permute.xlu0 0
        %844 = vperm.xlu0 %843, %v738
        %v845 = vpop.permute.xlu0 %844
        %848 = vset.pattern.permute.xlu0 0
        %849 = vperm.xlu0 %848, %v739
        %v850 = vpop.permute.xlu0 %849
        %853 = vset.pattern.permute.xlu0 0
        %854 = vperm.xlu0 %853, %v740
        %v855 = vpop.permute.xlu0 %854
        %858 = vset.pattern.permute.xlu0 0
        %859 = vperm.xlu0 %858, %v741
        %v860 = vpop.permute.xlu0 %859
        %863 = vset.pattern.permute.xlu0 0
        %864 = vperm.xlu0 %863, %v742
        %v865 = vpop.permute.xlu0 %864
        %868 = vset.pattern.permute.xlu0 0
        %869 = vperm.xlu0 %868, %v743
        %v870 = vpop.permute.xlu0 %869
        %v872 = vsel %vm824, %v835, 0.0
        %v873 = vsel %vm825, %v840, 0.0
        %v874 = vsel %vm826, %v845, 0.0
        %v875 = vsel %vm827, %v850, 0.0
        %v876 = vsel %vm828, %v855, 0.0
        %v877 = vsel %vm829, %v860, 0.0
        %v878 = vsel %vm830, %v865, 0.0
        %v879 = vsel %vm831, %v870, 0.0
        %v880 = vadd.f32 %v680, %v872
        %v881 = vadd.f32 %v681, %v873
        %v882 = vadd.f32 %v682, %v874
        %v883 = vadd.f32 %v683, %v875
        %v884 = vadd.f32 %v684, %v876
        %v885 = vadd.f32 %v685, %v877
        %v886 = vadd.f32 %v686, %v878
        %v887 = vadd.f32 %v687, %v879
        %896 = vrot.lane.b32.xlu0 %v358, 127
        %v897 = vpop.permute.xlu0 %896
        %898 = vrot.lane.b32.xlu0 %v359, 127
        %v899 = vpop.permute.xlu0 %898
        %900 = vrot.lane.b32.xlu0 %v360, 127
        %v901 = vpop.permute.xlu0 %900
        %902 = vrot.lane.b32.xlu0 %v361, 127
        %v903 = vpop.permute.xlu0 %902
        %904 = vrot.lane.b32.xlu0 %v362, 127
        %v905 = vpop.permute.xlu0 %904
        %906 = vrot.lane.b32.xlu0 %v363, 127
        %v907 = vpop.permute.xlu0 %906
        %908 = vrot.lane.b32.xlu0 %v364, 127
        %v909 = vpop.permute.xlu0 %908
        %910 = vrot.lane.b32.xlu0 %v365, 127
        %v911 = vpop.permute.xlu0 %910
        %v920 = vmul.f32 %v366, %v897
        %v921 = vmul.f32 %v367, %v899
        %v922 = vmul.f32 %v368, %v901
        %v923 = vmul.f32 %v369, %v903
        %v924 = vmul.f32 %v370, %v905
        %v925 = vmul.f32 %v371, %v907
        %v926 = vmul.f32 %v372, %v909
        %v927 = vmul.f32 %v373, %v911
        %v928 = vsel %vm696, 1, 0
        %v929 = vsel %vm697, 1, 0
        %v930 = vsel %vm698, 1, 0
        %v931 = vsel %vm699, 1, 0
        %v932 = vsel %vm700, 1, 0
        %v933 = vsel %vm701, 1, 0
        %v934 = vsel %vm702, 1, 0
        %v935 = vsel %vm703, 1, 0
        %936 = vrot.lane.b32.xlu0 %v928, 127
        %v937 = vpop.permute.xlu0 %936
        %938 = vrot.lane.b32.xlu0 %v929, 127
        %v939 = vpop.permute.xlu0 %938
        %940 = vrot.lane.b32.xlu0 %v930, 127
        %v941 = vpop.permute.xlu0 %940
        %942 = vrot.lane.b32.xlu0 %v931, 127
        %v943 = vpop.permute.xlu0 %942
        %944 = vrot.lane.b32.xlu0 %v932, 127
        %v945 = vpop.permute.xlu0 %944
        %946 = vrot.lane.b32.xlu0 %v933, 127
        %v947 = vpop.permute.xlu0 %946
        %948 = vrot.lane.b32.xlu0 %v934, 127
        %v949 = vpop.permute.xlu0 %948
        %950 = vrot.lane.b32.xlu0 %v935, 127
        %v951 = vpop.permute.xlu0 %950
        %vm952 = vcmp.ne.s32.totalorder %v937, 0
        %vm953 = vcmp.ne.s32.totalorder %v939, 0
        %vm954 = vcmp.ne.s32.totalorder %v941, 0
        %vm955 = vcmp.ne.s32.totalorder %v943, 0
        %vm956 = vcmp.ne.s32.totalorder %v945, 0
        %vm957 = vcmp.ne.s32.totalorder %v947, 0
        %vm958 = vcmp.ne.s32.totalorder %v949, 0
        %vm959 = vcmp.ne.s32.totalorder %v951, 0
        %vm960 = vmand %vm448, %vm952
        %vm961 = vmand %vm449, %vm953
        %vm962 = vmand %vm450, %vm954
        %vm963 = vmand %vm451, %vm955
        %vm964 = vmand %vm452, %vm956
        %vm965 = vmand %vm453, %vm957
        %vm966 = vmand %vm454, %vm958
        %vm967 = vmand %vm455, %vm959
        %v968 = vsel %vm704, 1, 0
        %v969 = vsel %vm705, 1, 0
        %v970 = vsel %vm706, 1, 0
        %v971 = vsel %vm707, 1, 0
        %v972 = vsel %vm708, 1, 0
        %v973 = vsel %vm709, 1, 0
        %v974 = vsel %vm710, 1, 0
        %v975 = vsel %vm711, 1, 0
        %976 = vrot.lane.b32.xlu0 %v968, 127
        %v977 = vpop.permute.xlu0 %976
        %978 = vrot.lane.b32.xlu0 %v969, 127
        %v979 = vpop.permute.xlu0 %978
        %980 = vrot.lane.b32.xlu0 %v970, 127
        %v981 = vpop.permute.xlu0 %980
        %982 = vrot.lane.b32.xlu0 %v971, 127
        %v983 = vpop.permute.xlu0 %982
        %984 = vrot.lane.b32.xlu0 %v972, 127
        %v985 = vpop.permute.xlu0 %984
        %986 = vrot.lane.b32.xlu0 %v973, 127
        %v987 = vpop.permute.xlu0 %986
        %988 = vrot.lane.b32.xlu0 %v974, 127
        %v989 = vpop.permute.xlu0 %988
        %990 = vrot.lane.b32.xlu0 %v975, 127
        %v991 = vpop.permute.xlu0 %990
        %vm992 = vcmp.ne.s32.totalorder %v977, 0
        %vm993 = vcmp.ne.s32.totalorder %v979, 0
        %vm994 = vcmp.ne.s32.totalorder %v981, 0
        %vm995 = vcmp.ne.s32.totalorder %v983, 0
        %vm996 = vcmp.ne.s32.totalorder %v985, 0
        %vm997 = vcmp.ne.s32.totalorder %v987, 0
        %vm998 = vcmp.ne.s32.totalorder %v989, 0
        %vm999 = vcmp.ne.s32.totalorder %v991, 0
        %vm1000 = vmand %vm960, %vm992
        %vm1001 = vmand %vm961, %vm993
        %vm1002 = vmand %vm962, %vm994
        %vm1003 = vmand %vm963, %vm995
        %vm1004 = vmand %vm964, %vm996
        %vm1005 = vmand %vm965, %vm997
        %vm1006 = vmand %vm966, %vm998
        %vm1007 = vmand %vm967, %vm999
        %v1008 = vsel %vm1000, %v920, 0.0
        %v1009 = vsel %vm1001, %v921, 0.0
        %v1010 = vsel %vm1002, %v922, 0.0
        %v1011 = vsel %vm1003, %v923, 0.0
        %v1012 = vsel %vm1004, %v924, 0.0
        %v1013 = vsel %vm1005, %v925, 0.0
        %v1014 = vsel %vm1006, %v926, 0.0
        %v1015 = vsel %vm1007, %v927, 0.0
        %v1016 = vmul.u32 %v761, 8
        %v1017 = vmul.u32 %v763, 8
        %v1018 = vmul.u32 %v765, 8
        %v1019 = vmul.u32 %v767, 8
        %v1020 = vmul.u32 %v769, 8
        %v1021 = vmul.u32 %v771, 8
        %v1022 = vmul.u32 %v773, 8
        %v1023 = vmul.u32 %v775, 8
        %v1024 = vadd.s32 %v1016, %v585
        %v1025 = vadd.s32 %v1017, %v587
        %v1026 = vadd.s32 %v1018, %v589
        %v1027 = vadd.s32 %v1019, %v591
        %v1028 = vadd.s32 %v1020, %v593
        %v1029 = vadd.s32 %v1021, %v595
        %v1030 = vadd.s32 %v1022, %v597
        %v1031 = vadd.s32 %v1023, %v599
        %1032 = vset.pattern.permute.xlu0 1
        %1033 = vperm.xlu0 %1032, %v1024
        %v1034 = vpop.permute.xlu0 %1033
        %1035 = vset.pattern.permute.xlu0 1
        %1036 = vperm.xlu0 %1035, %v1025
        %v1037 = vpop.permute.xlu0 %1036
        %1038 = vset.pattern.permute.xlu0 1
        %1039 = vperm.xlu0 %1038, %v1026
        %v1040 = vpop.permute.xlu0 %1039
        %1041 = vset.pattern.permute.xlu0 1
        %1042 = vperm.xlu0 %1041, %v1027
        %v1043 = vpop.permute.xlu0 %1042
        %1044 = vset.pattern.permute.xlu0 1
        %1045 = vperm.xlu0 %1044, %v1028
        %v1046 = vpop.permute.xlu0 %1045
        %1047 = vset.pattern.permute.xlu0 1
        %1048 = vperm.xlu0 %1047, %v1029
        %v1049 = vpop.permute.xlu0 %1048
        %1050 = vset.pattern.permute.xlu0 1
        %1051 = vperm.xlu0 %1050, %v1030
        %v1052 = vpop.permute.xlu0 %1051
        %1053 = vset.pattern.permute.xlu0 1
        %1054 = vperm.xlu0 %1053, %v1031
        %v1055 = vpop.permute.xlu0 %1054
        %vm1056 = vcmp.eq.s32.totalorder %v391, %v1034
        %vm1057 = vcmp.eq.s32.totalorder %v391, %v1037
        %vm1058 = vcmp.eq.s32.totalorder %v391, %v1040
        %vm1059 = vcmp.eq.s32.totalorder %v391, %v1043
        %vm1060 = vcmp.eq.s32.totalorder %v391, %v1046
        %vm1061 = vcmp.eq.s32.totalorder %v391, %v1049
        %vm1062 = vcmp.eq.s32.totalorder %v391, %v1052
        %vm1063 = vcmp.eq.s32.totalorder %v391, %v1055
        %1065 = vset.pattern.permute.xlu0 0
        %1066 = vperm.xlu0 %1065, %v1008
        %v1067 = vpop.permute.xlu0 %1066
        %1070 = vset.pattern.permute.xlu0 0
        %1071 = vperm.xlu0 %1070, %v1009
        %v1072 = vpop.permute.xlu0 %1071
        %1075 = vset.pattern.permute.xlu0 0
        %1076 = vperm.xlu0 %1075, %v1010
        %v1077 = vpop.permute.xlu0 %1076
        %1080 = vset.pattern.permute.xlu0 0
        %1081 = vperm.xlu0 %1080, %v1011
        %v1082 = vpop.permute.xlu0 %1081
        %1085 = vset.pattern.permute.xlu0 0
        %1086 = vperm.xlu0 %1085, %v1012
        %v1087 = vpop.permute.xlu0 %1086
        %1090 = vset.pattern.permute.xlu0 0
        %1091 = vperm.xlu0 %1090, %v1013
        %v1092 = vpop.permute.xlu0 %1091
        %1095 = vset.pattern.permute.xlu0 0
        %1096 = vperm.xlu0 %1095, %v1014
        %v1097 = vpop.permute.xlu0 %1096
        %1100 = vset.pattern.permute.xlu0 0
        %1101 = vperm.xlu0 %1100, %v1015
        %v1102 = vpop.permute.xlu0 %1101
        %v1104 = vsel %vm1056, %v1067, 0.0
        %v1105 = vsel %vm1057, %v1072, 0.0
        %v1106 = vsel %vm1058, %v1077, 0.0
        %v1107 = vsel %vm1059, %v1082, 0.0
        %v1108 = vsel %vm1060, %v1087, 0.0
        %v1109 = vsel %vm1061, %v1092, 0.0
        %v1110 = vsel %vm1062, %v1097, 0.0
        %v1111 = vsel %vm1063, %v1102, 0.0
        %v1112 = vadd.f32 %v880, %v1104
        %v1113 = vadd.f32 %v881, %v1105
        %v1114 = vadd.f32 %v882, %v1106
        %v1115 = vadd.f32 %v883, %v1107
        %v1116 = vadd.f32 %v884, %v1108
        %v1117 = vadd.f32 %v885, %v1109
        %v1118 = vadd.f32 %v886, %v1110
        %v1119 = vadd.f32 %v887, %v1111
        %v1120 = vmul.f32 %v358, %v897
        %v1121 = vmul.f32 %v359, %v899
        %v1122 = vmul.f32 %v360, %v901
        %v1123 = vmul.f32 %v361, %v903
        %v1124 = vmul.f32 %v362, %v905
        %v1125 = vmul.f32 %v363, %v907
        %v1126 = vmul.f32 %v364, %v909
        %v1127 = vmul.f32 %v365, %v911
        %vm1128 = vmand %vm712, %vm952
        %vm1129 = vmand %vm713, %vm953
        %vm1130 = vmand %vm714, %vm954
        %vm1131 = vmand %vm715, %vm955
        %vm1132 = vmand %vm716, %vm956
        %vm1133 = vmand %vm717, %vm957
        %vm1134 = vmand %vm718, %vm958
        %vm1135 = vmand %vm719, %vm959
        %vm1136 = vmand %vm1128, %vm992
        %vm1137 = vmand %vm1129, %vm993
        %vm1138 = vmand %vm1130, %vm994
        %vm1139 = vmand %vm1131, %vm995
        %vm1140 = vmand %vm1132, %vm996
        %vm1141 = vmand %vm1133, %vm997
        %vm1142 = vmand %vm1134, %vm998
        %vm1143 = vmand %vm1135, %vm999
        %v1144 = vsel %vm1136, %v1120, 0.0
        %v1145 = vsel %vm1137, %v1121, 0.0
        %v1146 = vsel %vm1138, %v1122, 0.0
        %v1147 = vsel %vm1139, %v1123, 0.0
        %v1148 = vsel %vm1140, %v1124, 0.0
        %v1149 = vsel %vm1141, %v1125, 0.0
        %v1150 = vsel %vm1142, %v1126, 0.0
        %v1151 = vsel %vm1143, %v1127, 0.0
        %v1152 = vadd.s32 %v1016, %v777
        %v1153 = vadd.s32 %v1017, %v779
        %v1154 = vadd.s32 %v1018, %v781
        %v1155 = vadd.s32 %v1019, %v783
        %v1156 = vadd.s32 %v1020, %v785
        %v1157 = vadd.s32 %v1021, %v787
        %v1158 = vadd.s32 %v1022, %v789
        %v1159 = vadd.s32 %v1023, %v791
        %1160 = vset.pattern.permute.xlu0 1
        %1161 = vperm.xlu0 %1160, %v1152
        %v1162 = vpop.permute.xlu0 %1161
        %1163 = vset.pattern.permute.xlu0 1
        %1164 = vperm.xlu0 %1163, %v1153
        %v1165 = vpop.permute.xlu0 %1164
        %1166 = vset.pattern.permute.xlu0 1
        %1167 = vperm.xlu0 %1166, %v1154
        %v1168 = vpop.permute.xlu0 %1167
        %1169 = vset.pattern.permute.xlu0 1
        %1170 = vperm.xlu0 %1169, %v1155
        %v1171 = vpop.permute.xlu0 %1170
        %1172 = vset.pattern.permute.xlu0 1
        %1173 = vperm.xlu0 %1172, %v1156
        %v1174 = vpop.permute.xlu0 %1173
        %1175 = vset.pattern.permute.xlu0 1
        %1176 = vperm.xlu0 %1175, %v1157
        %v1177 = vpop.permute.xlu0 %1176
        %1178 = vset.pattern.permute.xlu0 1
        %1179 = vperm.xlu0 %1178, %v1158
        %v1180 = vpop.permute.xlu0 %1179
        %1181 = vset.pattern.permute.xlu0 1
        %1182 = vperm.xlu0 %1181, %v1159
        %v1183 = vpop.permute.xlu0 %1182
        %vm1184 = vcmp.eq.s32.totalorder %v391, %v1162
        %vm1185 = vcmp.eq.s32.totalorder %v391, %v1165
        %vm1186 = vcmp.eq.s32.totalorder %v391, %v1168
        %vm1187 = vcmp.eq.s32.totalorder %v391, %v1171
        %vm1188 = vcmp.eq.s32.totalorder %v391, %v1174
        %vm1189 = vcmp.eq.s32.totalorder %v391, %v1177
        %vm1190 = vcmp.eq.s32.totalorder %v391, %v1180
        %vm1191 = vcmp.eq.s32.totalorder %v391, %v1183
        %1193 = vset.pattern.permute.xlu0 0
        %1194 = vperm.xlu0 %1193, %v1144
        %v1195 = vpop.permute.xlu0 %1194
        %1198 = vset.pattern.permute.xlu0 0
        %1199 = vperm.xlu0 %1198, %v1145
        %v1200 = vpop.permute.xlu0 %1199
        %1203 = vset.pattern.permute.xlu0 0
        %1204 = vperm.xlu0 %1203, %v1146
        %v1205 = vpop.permute.xlu0 %1204
        %1208 = vset.pattern.permute.xlu0 0
        %1209 = vperm.xlu0 %1208, %v1147
        %v1210 = vpop.permute.xlu0 %1209
        %1213 = vset.pattern.permute.xlu0 0
        %1214 = vperm.xlu0 %1213, %v1148
        %v1215 = vpop.permute.xlu0 %1214
        %1218 = vset.pattern.permute.xlu0 0
        %1219 = vperm.xlu0 %1218, %v1149
        %v1220 = vpop.permute.xlu0 %1219
        %1223 = vset.pattern.permute.xlu0 0
        %1224 = vperm.xlu0 %1223, %v1150
        %v1225 = vpop.permute.xlu0 %1224
        %1228 = vset.pattern.permute.xlu0 0
        %1229 = vperm.xlu0 %1228, %v1151
        %v1230 = vpop.permute.xlu0 %1229
        %v1232 = vsel %vm1184, %v1195, 0.0
        %v1233 = vsel %vm1185, %v1200, 0.0
        %v1234 = vsel %vm1186, %v1205, 0.0
        %v1235 = vsel %vm1187, %v1210, 0.0
        %v1236 = vsel %vm1188, %v1215, 0.0
        %v1237 = vsel %vm1189, %v1220, 0.0
        %v1238 = vsel %vm1190, %v1225, 0.0
        %v1239 = vsel %vm1191, %v1230, 0.0
        %v1240 = vadd.f32 %v1112, %v1232
        %v1241 = vadd.f32 %v1113, %v1233
        %v1242 = vadd.f32 %v1114, %v1234
        %v1243 = vadd.f32 %v1115, %v1235
        %v1244 = vadd.f32 %v1116, %v1236
        %v1245 = vadd.f32 %v1117, %v1237
        %v1246 = vadd.f32 %v1118, %v1238
        %v1247 = vadd.f32 %v1119, %v1239
        %v1248 = vpack.c.bf16 %v1241, %v1240
        %v1249 = vpack.c.bf16 %v1243, %v1242
        %v1250 = vpack.c.bf16 %v1245, %v1244
        %v1251 = vpack.c.bf16 %v1247, %v1246
        %v1252 = vld [vmem:[%s255] sm:$0xff]
        %v1253 = vld [vmem:[%s255 + $0x8] sm:$0xff]
        %v1254 = vld [vmem:[%s255 + $0x10] sm:$0xff]
        %v1255 = vld [vmem:[%s255 + $0x18] sm:$0xff]
        %v1256 = vld [vmem:[%s255 + $0x20] sm:$0xff]
        %v1257 = vld [vmem:[%s255 + $0x28] sm:$0xff]
        %v1258 = vld [vmem:[%s255 + $0x30] sm:$0xff]
        %v1259 = vld [vmem:[%s255 + $0x38] sm:$0xff]
        %v1260 = vld [vmem:[%s255 + $0x40] sm:$0xff]
        %v1261 = vld [vmem:[%s255 + $0x48] sm:$0xff]
        %v1262 = vld [vmem:[%s255 + $0x50] sm:$0xff]
        %v1263 = vld [vmem:[%s255 + $0x58] sm:$0xff]
        %v1264 = vld [vmem:[%s255 + $0x60] sm:$0xff]
        %v1265 = vld [vmem:[%s255 + $0x68] sm:$0xff]
        %v1266 = vld [vmem:[%s255 + $0x70] sm:$0xff]
        %v1267 = vld [vmem:[%s255 + $0x78] sm:$0xff]
        %v1268 = vld [vmem:[%s255 + $0x80] sm:$0xff]
        %v1269 = vld [vmem:[%s255 + $0x88] sm:$0xff]
        %v1270 = vld [vmem:[%s255 + $0x90] sm:$0xff]
        %v1271 = vld [vmem:[%s255 + $0x98] sm:$0xff]
        %v1272 = vld [vmem:[%s255 + $0xa0] sm:$0xff]
        %v1273 = vld [vmem:[%s255 + $0xa8] sm:$0xff]
        %v1274 = vld [vmem:[%s255 + $0xb0] sm:$0xff]
        %v1275 = vld [vmem:[%s255 + $0xb8] sm:$0xff]
        %v1276 = vld [vmem:[%s255 + $0xc0] sm:$0xff]
        %v1277 = vld [vmem:[%s255 + $0xc8] sm:$0xff]
        %v1278 = vld [vmem:[%s255 + $0xd0] sm:$0xff]
        %v1279 = vld [vmem:[%s255 + $0xd8] sm:$0xff]
        %v1280 = vld [vmem:[%s255 + $0xe0] sm:$0xff]
        %v1281 = vld [vmem:[%s255 + $0xe8] sm:$0xff]
        %v1282 = vld [vmem:[%s255 + $0xf0] sm:$0xff]
        %v1283 = vld [vmem:[%s255 + $0xf8] sm:$0xff]
        %v1284 = vld [vmem:[%s255 + $0x100] sm:$0xff]
        %v1285 = vld [vmem:[%s255 + $0x108] sm:$0xff]
        %v1286 = vld [vmem:[%s255 + $0x110] sm:$0xff]
        %v1287 = vld [vmem:[%s255 + $0x118] sm:$0xff]
        %v1288 = vld [vmem:[%s255 + $0x120] sm:$0xff]
        %v1289 = vld [vmem:[%s255 + $0x128] sm:$0xff]
        %v1290 = vld [vmem:[%s255 + $0x130] sm:$0xff]
        %v1291 = vld [vmem:[%s255 + $0x138] sm:$0xff]
        %v1292 = vld [vmem:[%s255 + $0x140] sm:$0xff]
        %v1293 = vld [vmem:[%s255 + $0x148] sm:$0xff]
        %v1294 = vld [vmem:[%s255 + $0x150] sm:$0xff]
        %v1295 = vld [vmem:[%s255 + $0x158] sm:$0xff]
        %v1296 = vld [vmem:[%s255 + $0x160] sm:$0xff]
        %v1297 = vld [vmem:[%s255 + $0x168] sm:$0xff]
        %v1298 = vld [vmem:[%s255 + $0x170] sm:$0xff]
        %v1299 = vld [vmem:[%s255 + $0x178] sm:$0xff]
        %v1300 = vld [vmem:[%s255 + $0x180] sm:$0xff]
        %v1301 = vld [vmem:[%s255 + $0x188] sm:$0xff]
        %v1302 = vld [vmem:[%s255 + $0x190] sm:$0xff]
        %v1303 = vld [vmem:[%s255 + $0x198] sm:$0xff]
        %v1304 = vld [vmem:[%s255 + $0x1a0] sm:$0xff]
        %v1305 = vld [vmem:[%s255 + $0x1a8] sm:$0xff]
        %v1306 = vld [vmem:[%s255 + $0x1b0] sm:$0xff]
        %v1307 = vld [vmem:[%s255 + $0x1b8] sm:$0xff]
        %v1308 = vld [vmem:[%s255 + $0x1c0] sm:$0xff]
        %v1309 = vld [vmem:[%s255 + $0x1c8] sm:$0xff]
        %v1310 = vld [vmem:[%s255 + $0x1d0] sm:$0xff]
        %v1311 = vld [vmem:[%s255 + $0x1d8] sm:$0xff]
        %v1312 = vld [vmem:[%s255 + $0x1e0] sm:$0xff]
        %v1313 = vld [vmem:[%s255 + $0x1e8] sm:$0xff]
        %v1314 = vld [vmem:[%s255 + $0x1f0] sm:$0xff]
        %v1315 = vld [vmem:[%s255 + $0x1f8] sm:$0xff]
        %v1316 = vld [vmem:[%s255 + $0x200] sm:$0xff]
        %v1317 = vld [vmem:[%s255 + $0x208] sm:$0xff]
        %v1318 = vld [vmem:[%s255 + $0x210] sm:$0xff]
        %v1319 = vld [vmem:[%s255 + $0x218] sm:$0xff]
        %v1320 = vld [vmem:[%s255 + $0x220] sm:$0xff]
        %v1321 = vld [vmem:[%s255 + $0x228] sm:$0xff]
        %v1322 = vld [vmem:[%s255 + $0x230] sm:$0xff]
        %v1323 = vld [vmem:[%s255 + $0x238] sm:$0xff]
        %v1324 = vld [vmem:[%s255 + $0x240] sm:$0xff]
        %v1325 = vld [vmem:[%s255 + $0x248] sm:$0xff]
        %v1326 = vld [vmem:[%s255 + $0x250] sm:$0xff]
        %v1327 = vld [vmem:[%s255 + $0x258] sm:$0xff]
        %v1328 = vld [vmem:[%s255 + $0x260] sm:$0xff]
        %v1329 = vld [vmem:[%s255 + $0x268] sm:$0xff]
        %v1330 = vld [vmem:[%s255 + $0x270] sm:$0xff]
        %v1331 = vld [vmem:[%s255 + $0x278] sm:$0xff]
        %v1332 = vld [vmem:[%s255 + $0x280] sm:$0xff]
        %v1333 = vld [vmem:[%s255 + $0x288] sm:$0xff]
        %v1334 = vld [vmem:[%s255 + $0x290] sm:$0xff]
        %v1335 = vld [vmem:[%s255 + $0x298] sm:$0xff]
        %v1336 = vld [vmem:[%s255 + $0x2a0] sm:$0xff]
        %v1337 = vld [vmem:[%s255 + $0x2a8] sm:$0xff]
        %v1338 = vld [vmem:[%s255 + $0x2b0] sm:$0xff]
        %v1339 = vld [vmem:[%s255 + $0x2b8] sm:$0xff]
        %v1340 = vld [vmem:[%s255 + $0x2c0] sm:$0xff]
        %v1341 = vld [vmem:[%s255 + $0x2c8] sm:$0xff]
        %v1342 = vld [vmem:[%s255 + $0x2d0] sm:$0xff]
        %v1343 = vld [vmem:[%s255 + $0x2d8] sm:$0xff]
        %v1344 = vld [vmem:[%s255 + $0x2e0] sm:$0xff]
        %v1345 = vld [vmem:[%s255 + $0x2e8] sm:$0xff]
        %v1346 = vld [vmem:[%s255 + $0x2f0] sm:$0xff]
        %v1347 = vld [vmem:[%s255 + $0x2f8] sm:$0xff]
        %v1348 = vld [vmem:[%s255 + $0x300] sm:$0xff]
        %v1349 = vld [vmem:[%s255 + $0x308] sm:$0xff]
        %v1350 = vld [vmem:[%s255 + $0x310] sm:$0xff]
        %v1351 = vld [vmem:[%s255 + $0x318] sm:$0xff]
        %v1352 = vld [vmem:[%s255 + $0x320] sm:$0xff]
        %v1353 = vld [vmem:[%s255 + $0x328] sm:$0xff]
        %v1354 = vld [vmem:[%s255 + $0x330] sm:$0xff]
        %v1355 = vld [vmem:[%s255 + $0x338] sm:$0xff]
        %v1356 = vld [vmem:[%s255 + $0x340] sm:$0xff]
        %v1357 = vld [vmem:[%s255 + $0x348] sm:$0xff]
        %v1358 = vld [vmem:[%s255 + $0x350] sm:$0xff]
        %v1359 = vld [vmem:[%s255 + $0x358] sm:$0xff]
        %v1360 = vld [vmem:[%s255 + $0x360] sm:$0xff]
        %v1361 = vld [vmem:[%s255 + $0x368] sm:$0xff]
        %v1362 = vld [vmem:[%s255 + $0x370] sm:$0xff]
        %v1363 = vld [vmem:[%s255 + $0x378] sm:$0xff]
        %v1364 = vld [vmem:[%s255 + $0x380] sm:$0xff]
        %v1365 = vld [vmem:[%s255 + $0x388] sm:$0xff]
        %v1366 = vld [vmem:[%s255 + $0x390] sm:$0xff]
        %v1367 = vld [vmem:[%s255 + $0x398] sm:$0xff]
        %v1368 = vld [vmem:[%s255 + $0x3a0] sm:$0xff]
        %v1369 = vld [vmem:[%s255 + $0x3a8] sm:$0xff]
        %v1370 = vld [vmem:[%s255 + $0x3b0] sm:$0xff]
        %v1371 = vld [vmem:[%s255 + $0x3b8] sm:$0xff]
        %v1372 = vld [vmem:[%s255 + $0x3c0] sm:$0xff]
        %v1373 = vld [vmem:[%s255 + $0x3c8] sm:$0xff]
        %v1374 = vld [vmem:[%s255 + $0x3d0] sm:$0xff]
        %v1375 = vld [vmem:[%s255 + $0x3d8] sm:$0xff]
        %v1376 = vld [vmem:[%s255 + $0x3e0] sm:$0xff]
        %v1377 = vld [vmem:[%s255 + $0x3e8] sm:$0xff]
        %v1378 = vld [vmem:[%s255 + $0x3f0] sm:$0xff]
        %v1379 = vld [vmem:[%s255 + $0x3f8] sm:$0xff]
        %v1380 = vpack.c.bf16 %v1268, %v1252
        %v1381 = vpack.c.bf16 %v1269, %v1253
        %v1382 = vpack.c.bf16 %v1270, %v1254
        %v1383 = vpack.c.bf16 %v1271, %v1255
        %v1384 = vpack.c.bf16 %v1272, %v1256
        %v1385 = vpack.c.bf16 %v1273, %v1257
        %v1386 = vpack.c.bf16 %v1274, %v1258
        %v1387 = vpack.c.bf16 %v1275, %v1259
        %v1388 = vpack.c.bf16 %v1276, %v1260
        %v1389 = vpack.c.bf16 %v1277, %v1261
        %v1390 = vpack.c.bf16 %v1278, %v1262
        %v1391 = vpack.c.bf16 %v1279, %v1263
        %v1392 = vpack.c.bf16 %v1280, %v1264
        %v1393 = vpack.c.bf16 %v1281, %v1265
        %v1394 = vpack.c.bf16 %v1282, %v1266
        %v1395 = vpack.c.bf16 %v1283, %v1267
        %v1396 = vpack.c.bf16 %v1300, %v1284
        %v1397 = vpack.c.bf16 %v1301, %v1285
        %v1398 = vpack.c.bf16 %v1302, %v1286
        %v1399 = vpack.c.bf16 %v1303, %v1287
        %v1400 = vpack.c.bf16 %v1304, %v1288
        %v1401 = vpack.c.bf16 %v1305, %v1289
        %v1402 = vpack.c.bf16 %v1306, %v1290
        %v1403 = vpack.c.bf16 %v1307, %v1291
        %v1404 = vpack.c.bf16 %v1308, %v1292
        %v1405 = vpack.c.bf16 %v1309, %v1293
        %v1406 = vpack.c.bf16 %v1310, %v1294
        %v1407 = vpack.c.bf16 %v1311, %v1295
        %v1408 = vpack.c.bf16 %v1312, %v1296
        %v1409 = vpack.c.bf16 %v1313, %v1297
        %v1410 = vpack.c.bf16 %v1314, %v1298
        %v1411 = vpack.c.bf16 %v1315, %v1299
        %v1412 = vpack.c.bf16 %v1332, %v1316
        %v1413 = vpack.c.bf16 %v1333, %v1317
        %v1414 = vpack.c.bf16 %v1334, %v1318
        %v1415 = vpack.c.bf16 %v1335, %v1319
        %v1416 = vpack.c.bf16 %v1336, %v1320
        %v1417 = vpack.c.bf16 %v1337, %v1321
        %v1418 = vpack.c.bf16 %v1338, %v1322
        %v1419 = vpack.c.bf16 %v1339, %v1323
        %v1420 = vpack.c.bf16 %v1340, %v1324
        %v1421 = vpack.c.bf16 %v1341, %v1325
        %v1422 = vpack.c.bf16 %v1342, %v1326
        %v1423 = vpack.c.bf16 %v1343, %v1327
        %v1424 = vpack.c.bf16 %v1344, %v1328
        %v1425 = vpack.c.bf16 %v1345, %v1329
        %v1426 = vpack.c.bf16 %v1346, %v1330
        %v1427 = vpack.c.bf16 %v1347, %v1331
        %v1428 = vpack.c.bf16 %v1364, %v1348
        %v1429 = vpack.c.bf16 %v1365, %v1349
        %v1430 = vpack.c.bf16 %v1366, %v1350
        %v1431 = vpack.c.bf16 %v1367, %v1351
        %v1432 = vpack.c.bf16 %v1368, %v1352
        %v1433 = vpack.c.bf16 %v1369, %v1353
        %v1434 = vpack.c.bf16 %v1370, %v1354
        %v1435 = vpack.c.bf16 %v1371, %v1355
        %v1436 = vpack.c.bf16 %v1372, %v1356
        %v1437 = vpack.c.bf16 %v1373, %v1357
        %v1438 = vpack.c.bf16 %v1374, %v1358
        %v1439 = vpack.c.bf16 %v1375, %v1359
        %v1440 = vpack.c.bf16 %v1376, %v1360
        %v1441 = vpack.c.bf16 %v1377, %v1361
        %v1442 = vpack.c.bf16 %v1378, %v1362
        %v1443 = vpack.c.bf16 %v1379, %v1363
        %vm1444 = vcmask 523264
        %v1446 = vsel %vm1444, %v1248, 0
        %v1449 = vsel %vm1444, %v1249, 0
        %v1452 = vsel %vm1444, %v1250, 0
        %v1455 = vsel %vm1444, %v1251, 0
        %1457 = vmatpush.bf16.msra.mxu0 0
        %1458 = vmatpush.bf16.msra.mxu0 0
        %1459 = vmatpush.bf16.msra.mxu0 0
        %1460 = vmatpush.bf16.msra.mxu0 0
        %1461 = vmatpush.bf16.msra.mxu0 %v1428
        %1462 = vmatpush.bf16.msra.mxu0 %v1412
        %1463 = vmatpush.bf16.msra.mxu0 %v1396
        %1464 = vmatpush.bf16.msra.mxu0 %v1380
        %1465 = vmatmul.bf16.gmra.mxu0 %v1446
        %v1466 = vpop.f32.mrf.mxu0
        %v1467 = vadd.f32 0.0, %v1466
        %v1468 = vpop.f32.mrf.mxu0
        %v1469 = vadd.f32 0.0, %v1468
        %1470 = vmatmul.bf16.gmra.mxu0 %v1449
        %v1471 = vpop.f32.mrf.mxu0
        %v1472 = vadd.f32 0.0, %v1471
        %v1473 = vpop.f32.mrf.mxu0
        %v1474 = vadd.f32 0.0, %v1473
        %1475 = vmatmul.bf16.gmra.mxu0 %v1452
        %v1476 = vpop.f32.mrf.mxu0
        %v1477 = vadd.f32 0.0, %v1476
        %v1478 = vpop.f32.mrf.mxu0
        %v1479 = vadd.f32 0.0, %v1478
        %1480 = vmatmul.bf16.gmra.mxu0 %v1455
        %v1481 = vpop.f32.mrf.mxu0
        %v1482 = vadd.f32 0.0, %v1481
        %v1483 = vpop.f32.mrf.mxu0
        %v1484 = vadd.f32 0.0, %v1483
        %1485 = vdwg.mxu0
        %1486 = vmatpush.bf16.msra.mxu0 0
        %1487 = vmatpush.bf16.msra.mxu0 0
        %1488 = vmatpush.bf16.msra.mxu0 0
        %1489 = vmatpush.bf16.msra.mxu0 0
        %1490 = vmatpush.bf16.msra.mxu0 %v1429
        %1491 = vmatpush.bf16.msra.mxu0 %v1413
        %1492 = vmatpush.bf16.msra.mxu0 %v1397
        %1493 = vmatpush.bf16.msra.mxu0 %v1381
        %1494 = vmatmul.bf16.gmra.mxu0 %v1446
        %v1495 = vpop.f32.mrf.mxu0
        %v1496 = vadd.f32 0.0, %v1495
        %v1497 = vpop.f32.mrf.mxu0
        %v1498 = vadd.f32 0.0, %v1497
        %1499 = vmatmul.bf16.gmra.mxu0 %v1449
        %v1500 = vpop.f32.mrf.mxu0
        %v1501 = vadd.f32 0.0, %v1500
        %v1502 = vpop.f32.mrf.mxu0
        %v1503 = vadd.f32 0.0, %v1502
        %1504 = vmatmul.bf16.gmra.mxu0 %v1452
        %v1505 = vpop.f32.mrf.mxu0
        %v1506 = vadd.f32 0.0, %v1505
        %v1507 = vpop.f32.mrf.mxu0
        %v1508 = vadd.f32 0.0, %v1507
        %1509 = vmatmul.bf16.gmra.mxu0 %v1455
        %v1510 = vpop.f32.mrf.mxu0
        %v1511 = vadd.f32 0.0, %v1510
        %v1512 = vpop.f32.mrf.mxu0
        %v1513 = vadd.f32 0.0, %v1512
        %1514 = vdwg.mxu0
        %1515 = vmatpush.bf16.msra.mxu0 0
        %1516 = vmatpush.bf16.msra.mxu0 0
        %1517 = vmatpush.bf16.msra.mxu0 0
        %1518 = vmatpush.bf16.msra.mxu0 0
        %1519 = vmatpush.bf16.msra.mxu0 %v1430
        %1520 = vmatpush.bf16.msra.mxu0 %v1414
        %1521 = vmatpush.bf16.msra.mxu0 %v1398
        %1522 = vmatpush.bf16.msra.mxu0 %v1382
        %1523 = vmatmul.bf16.gmra.mxu0 %v1446
        %v1524 = vpop.f32.mrf.mxu0
        %v1525 = vadd.f32 0.0, %v1524
        %v1526 = vpop.f32.mrf.mxu0
        %v1527 = vadd.f32 0.0, %v1526
        %1528 = vmatmul.bf16.gmra.mxu0 %v1449
        %v1529 = vpop.f32.mrf.mxu0
        %v1530 = vadd.f32 0.0, %v1529
        %v1531 = vpop.f32.mrf.mxu0
        %v1532 = vadd.f32 0.0, %v1531
        %1533 = vmatmul.bf16.gmra.mxu0 %v1452
        %v1534 = vpop.f32.mrf.mxu0
        %v1535 = vadd.f32 0.0, %v1534
        %v1536 = vpop.f32.mrf.mxu0
        %v1537 = vadd.f32 0.0, %v1536
        %1538 = vmatmul.bf16.gmra.mxu0 %v1455
        %v1539 = vpop.f32.mrf.mxu0
        %v1540 = vadd.f32 0.0, %v1539
        %v1541 = vpop.f32.mrf.mxu0
        %v1542 = vadd.f32 0.0, %v1541
        %1543 = vdwg.mxu0
        %1544 = vmatpush.bf16.msra.mxu0 0
        %1545 = vmatpush.bf16.msra.mxu0 0
        %1546 = vmatpush.bf16.msra.mxu0 0
        %1547 = vmatpush.bf16.msra.mxu0 0
        %1548 = vmatpush.bf16.msra.mxu0 %v1431
        %1549 = vmatpush.bf16.msra.mxu0 %v1415
        %1550 = vmatpush.bf16.msra.mxu0 %v1399
        %1551 = vmatpush.bf16.msra.mxu0 %v1383
        %1552 = vmatmul.bf16.gmra.mxu0 %v1446
        %v1553 = vpop.f32.mrf.mxu0
        %v1554 = vadd.f32 0.0, %v1553
        %v1555 = vpop.f32.mrf.mxu0
        %v1556 = vadd.f32 0.0, %v1555
        %1557 = vmatmul.bf16.gmra.mxu0 %v1449
        %v1558 = vpop.f32.mrf.mxu0
        %v1559 = vadd.f32 0.0, %v1558
        %v1560 = vpop.f32.mrf.mxu0
        %v1561 = vadd.f32 0.0, %v1560
        %1562 = vmatmul.bf16.gmra.mxu0 %v1452
        %v1563 = vpop.f32.mrf.mxu0
        %v1564 = vadd.f32 0.0, %v1563
        %v1565 = vpop.f32.mrf.mxu0
        %v1566 = vadd.f32 0.0, %v1565
        %1567 = vmatmul.bf16.gmra.mxu0 %v1455
        %v1568 = vpop.f32.mrf.mxu0
        %v1569 = vadd.f32 0.0, %v1568
        %v1570 = vpop.f32.mrf.mxu0
        %v1571 = vadd.f32 0.0, %v1570
        %1572 = vdwg.mxu0
        %1573 = vmatpush.bf16.msra.mxu0 0
        %1574 = vmatpush.bf16.msra.mxu0 0
        %1575 = vmatpush.bf16.msra.mxu0 0
        %1576 = vmatpush.bf16.msra.mxu0 0
        %1577 = vmatpush.bf16.msra.mxu0 %v1432
        %1578 = vmatpush.bf16.msra.mxu0 %v1416
        %1579 = vmatpush.bf16.msra.mxu0 %v1400
        %1580 = vmatpush.bf16.msra.mxu0 %v1384
        %1581 = vmatmul.bf16.gmra.mxu0 %v1446
        %v1582 = vpop.f32.mrf.mxu0
        %v1583 = vadd.f32 0.0, %v1582
        %v1584 = vpop.f32.mrf.mxu0
        %v1585 = vadd.f32 0.0, %v1584
        %1586 = vmatmul.bf16.gmra.mxu0 %v1449
        %v1587 = vpop.f32.mrf.mxu0
        %v1588 = vadd.f32 0.0, %v1587
        %v1589 = vpop.f32.mrf.mxu0
        %v1590 = vadd.f32 0.0, %v1589
        %1591 = vmatmul.bf16.gmra.mxu0 %v1452
        %v1592 = vpop.f32.mrf.mxu0
        %v1593 = vadd.f32 0.0, %v1592
        %v1594 = vpop.f32.mrf.mxu0
        %v1595 = vadd.f32 0.0, %v1594
        %1596 = vmatmul.bf16.gmra.mxu0 %v1455
        %v1597 = vpop.f32.mrf.mxu0
        %v1598 = vadd.f32 0.0, %v1597
        %v1599 = vpop.f32.mrf.mxu0
        %v1600 = vadd.f32 0.0, %v1599
        %1601 = vdwg.mxu0
        %1602 = vmatpush.bf16.msra.mxu0 0
        %1603 = vmatpush.bf16.msra.mxu0 0
        %1604 = vmatpush.bf16.msra.mxu0 0
        %1605 = vmatpush.bf16.msra.mxu0 0
        %1606 = vmatpush.bf16.msra.mxu0 %v1433
        %1607 = vmatpush.bf16.msra.mxu0 %v1417
        %1608 = vmatpush.bf16.msra.mxu0 %v1401
        %1609 = vmatpush.bf16.msra.mxu0 %v1385
        %1610 = vmatmul.bf16.gmra.mxu0 %v1446
        %v1611 = vpop.f32.mrf.mxu0
        %v1612 = vadd.f32 0.0, %v1611
        %v1613 = vpop.f32.mrf.mxu0
        %v1614 = vadd.f32 0.0, %v1613
        %1615 = vmatmul.bf16.gmra.mxu0 %v1449
        %v1616 = vpop.f32.mrf.mxu0
        %v1617 = vadd.f32 0.0, %v1616
        %v1618 = vpop.f32.mrf.mxu0
        %v1619 = vadd.f32 0.0, %v1618
        %1620 = vmatmul.bf16.gmra.mxu0 %v1452
        %v1621 = vpop.f32.mrf.mxu0
        %v1622 = vadd.f32 0.0, %v1621
        %v1623 = vpop.f32.mrf.mxu0
        %v1624 = vadd.f32 0.0, %v1623
        %1625 = vmatmul.bf16.gmra.mxu0 %v1455
        %v1626 = vpop.f32.mrf.mxu0
        %v1627 = vadd.f32 0.0, %v1626
        %v1628 = vpop.f32.mrf.mxu0
        %v1629 = vadd.f32 0.0, %v1628
        %1630 = vdwg.mxu0
        %1631 = vmatpush.bf16.msra.mxu0 0
        %1632 = vmatpush.bf16.msra.mxu0 0
        %1633 = vmatpush.bf16.msra.mxu0 0
        %1634 = vmatpush.bf16.msra.mxu0 0
        %1635 = vmatpush.bf16.msra.mxu0 %v1434
        %1636 = vmatpush.bf16.msra.mxu0 %v1418
        %1637 = vmatpush.bf16.msra.mxu0 %v1402
        %1638 = vmatpush.bf16.msra.mxu0 %v1386
        %1639 = vmatmul.bf16.gmra.mxu0 %v1446
        %v1640 = vpop.f32.mrf.mxu0
        %v1641 = vadd.f32 0.0, %v1640
        %v1642 = vpop.f32.mrf.mxu0
        %v1643 = vadd.f32 0.0, %v1642
        %1644 = vmatmul.bf16.gmra.mxu0 %v1449
        %v1645 = vpop.f32.mrf.mxu0
        %v1646 = vadd.f32 0.0, %v1645
        %v1647 = vpop.f32.mrf.mxu0
        %v1648 = vadd.f32 0.0, %v1647
        %1649 = vmatmul.bf16.gmra.mxu0 %v1452
        %v1650 = vpop.f32.mrf.mxu0
        %v1651 = vadd.f32 0.0, %v1650
        %v1652 = vpop.f32.mrf.mxu0
        %v1653 = vadd.f32 0.0, %v1652
        %1654 = vmatmul.bf16.gmra.mxu0 %v1455
        %v1655 = vpop.f32.mrf.mxu0
        %v1656 = vadd.f32 0.0, %v1655
        %v1657 = vpop.f32.mrf.mxu0
        %v1658 = vadd.f32 0.0, %v1657
        %1659 = vdwg.mxu0
        %1660 = vmatpush.bf16.msra.mxu0 0
        %1661 = vmatpush.bf16.msra.mxu0 0
        %1662 = vmatpush.bf16.msra.mxu0 0
        %1663 = vmatpush.bf16.msra.mxu0 0
        %1664 = vmatpush.bf16.msra.mxu0 %v1435
        %1665 = vmatpush.bf16.msra.mxu0 %v1419
        %1666 = vmatpush.bf16.msra.mxu0 %v1403
        %1667 = vmatpush.bf16.msra.mxu0 %v1387
        %1668 = vmatmul.bf16.gmra.mxu0 %v1446
        %v1669 = vpop.f32.mrf.mxu0
        %v1670 = vadd.f32 0.0, %v1669
        %v1671 = vpop.f32.mrf.mxu0
        %v1672 = vadd.f32 0.0, %v1671
        %1673 = vmatmul.bf16.gmra.mxu0 %v1449
        %v1674 = vpop.f32.mrf.mxu0
        %v1675 = vadd.f32 0.0, %v1674
        %v1676 = vpop.f32.mrf.mxu0
        %v1677 = vadd.f32 0.0, %v1676
        %1678 = vmatmul.bf16.gmra.mxu0 %v1452
        %v1679 = vpop.f32.mrf.mxu0
        %v1680 = vadd.f32 0.0, %v1679
        %v1681 = vpop.f32.mrf.mxu0
        %v1682 = vadd.f32 0.0, %v1681
        %1683 = vmatmul.bf16.gmra.mxu0 %v1455
        %v1684 = vpop.f32.mrf.mxu0
        %v1685 = vadd.f32 0.0, %v1684
        %v1686 = vpop.f32.mrf.mxu0
        %v1687 = vadd.f32 0.0, %v1686
        %1688 = vdwg.mxu0
        %1689 = vmatpush.bf16.msra.mxu0 0
        %1690 = vmatpush.bf16.msra.mxu0 0
        %1691 = vmatpush.bf16.msra.mxu0 0
        %1692 = vmatpush.bf16.msra.mxu0 0
        %1693 = vmatpush.bf16.msra.mxu0 %v1436
        %1694 = vmatpush.bf16.msra.mxu0 %v1420
        %1695 = vmatpush.bf16.msra.mxu0 %v1404
        %1696 = vmatpush.bf16.msra.mxu0 %v1388
        %1697 = vmatmul.bf16.gmra.mxu0 %v1446
        %v1698 = vpop.f32.mrf.mxu0
        %v1699 = vadd.f32 0.0, %v1698
        %v1700 = vpop.f32.mrf.mxu0
        %v1701 = vadd.f32 0.0, %v1700
        %1702 = vmatmul.bf16.gmra.mxu0 %v1449
        %v1703 = vpop.f32.mrf.mxu0
        %v1704 = vadd.f32 0.0, %v1703
        %v1705 = vpop.f32.mrf.mxu0
        %v1706 = vadd.f32 0.0, %v1705
        %1707 = vmatmul.bf16.gmra.mxu0 %v1452
        %v1708 = vpop.f32.mrf.mxu0
        %v1709 = vadd.f32 0.0, %v1708
        %v1710 = vpop.f32.mrf.mxu0
        %v1711 = vadd.f32 0.0, %v1710
        %1712 = vmatmul.bf16.gmra.mxu0 %v1455
        %v1713 = vpop.f32.mrf.mxu0
        %v1714 = vadd.f32 0.0, %v1713
        %v1715 = vpop.f32.mrf.mxu0
        %v1716 = vadd.f32 0.0, %v1715
        %1717 = vdwg.mxu0
        %1718 = vmatpush.bf16.msra.mxu0 0
        %1719 = vmatpush.bf16.msra.mxu0 0
        %1720 = vmatpush.bf16.msra.mxu0 0
        %1721 = vmatpush.bf16.msra.mxu0 0
        %1722 = vmatpush.bf16.msra.mxu0 %v1437
        %1723 = vmatpush.bf16.msra.mxu0 %v1421
        %1724 = vmatpush.bf16.msra.mxu0 %v1405
        %1725 = vmatpush.bf16.msra.mxu0 %v1389
        %1726 = vmatmul.bf16.gmra.mxu0 %v1446
        %v1727 = vpop.f32.mrf.mxu0
        %v1728 = vadd.f32 0.0, %v1727
        %v1729 = vpop.f32.mrf.mxu0
        %v1730 = vadd.f32 0.0, %v1729
        %1731 = vmatmul.bf16.gmra.mxu0 %v1449
        %v1732 = vpop.f32.mrf.mxu0
        %v1733 = vadd.f32 0.0, %v1732
        %v1734 = vpop.f32.mrf.mxu0
        %v1735 = vadd.f32 0.0, %v1734
        %1736 = vmatmul.bf16.gmra.mxu0 %v1452
        %v1737 = vpop.f32.mrf.mxu0
        %v1738 = vadd.f32 0.0, %v1737
        %v1739 = vpop.f32.mrf.mxu0
        %v1740 = vadd.f32 0.0, %v1739
        %1741 = vmatmul.bf16.gmra.mxu0 %v1455
        %v1742 = vpop.f32.mrf.mxu0
        %v1743 = vadd.f32 0.0, %v1742
        %v1744 = vpop.f32.mrf.mxu0
        %v1745 = vadd.f32 0.0, %v1744
        %1746 = vdwg.mxu0
        %1747 = vmatpush.bf16.msra.mxu0 0
        %1748 = vmatpush.bf16.msra.mxu0 0
        %1749 = vmatpush.bf16.msra.mxu0 0
        %1750 = vmatpush.bf16.msra.mxu0 0
        %1751 = vmatpush.bf16.msra.mxu0 %v1438
        %1752 = vmatpush.bf16.msra.mxu0 %v1422
        %1753 = vmatpush.bf16.msra.mxu0 %v1406
        %1754 = vmatpush.bf16.msra.mxu0 %v1390
        %1755 = vmatmul.bf16.gmra.mxu0 %v1446
        %v1756 = vpop.f32.mrf.mxu0
        %v1757 = vadd.f32 0.0, %v1756
        %v1758 = vpop.f32.mrf.mxu0
        %v1759 = vadd.f32 0.0, %v1758
        %1760 = vmatmul.bf16.gmra.mxu0 %v1449
        %v1761 = vpop.f32.mrf.mxu0
        %v1762 = vadd.f32 0.0, %v1761
        %v1763 = vpop.f32.mrf.mxu0
        %v1764 = vadd.f32 0.0, %v1763
        %1765 = vmatmul.bf16.gmra.mxu0 %v1452
        %v1766 = vpop.f32.mrf.mxu0
        %v1767 = vadd.f32 0.0, %v1766
        %v1768 = vpop.f32.mrf.mxu0
        %v1769 = vadd.f32 0.0, %v1768
        %1770 = vmatmul.bf16.gmra.mxu0 %v1455
        %v1771 = vpop.f32.mrf.mxu0
        %v1772 = vadd.f32 0.0, %v1771
        %v1773 = vpop.f32.mrf.mxu0
        %v1774 = vadd.f32 0.0, %v1773
        %1775 = vdwg.mxu0
        %1776 = vmatpush.bf16.msra.mxu0 0
        %1777 = vmatpush.bf16.msra.mxu0 0
        %1778 = vmatpush.bf16.msra.mxu0 0
        %1779 = vmatpush.bf16.msra.mxu0 0
        %1780 = vmatpush.bf16.msra.mxu0 %v1439
        %1781 = vmatpush.bf16.msra.mxu0 %v1423
        %1782 = vmatpush.bf16.msra.mxu0 %v1407
        %1783 = vmatpush.bf16.msra.mxu0 %v1391
        %1784 = vmatmul.bf16.gmra.mxu0 %v1446
        %v1785 = vpop.f32.mrf.mxu0
        %v1786 = vadd.f32 0.0, %v1785
        %v1787 = vpop.f32.mrf.mxu0
        %v1788 = vadd.f32 0.0, %v1787
        %1789 = vmatmul.bf16.gmra.mxu0 %v1449
        %v1790 = vpop.f32.mrf.mxu0
        %v1791 = vadd.f32 0.0, %v1790
        %v1792 = vpop.f32.mrf.mxu0
        %v1793 = vadd.f32 0.0, %v1792
        %1794 = vmatmul.bf16.gmra.mxu0 %v1452
        %v1795 = vpop.f32.mrf.mxu0
        %v1796 = vadd.f32 0.0, %v1795
        %v1797 = vpop.f32.mrf.mxu0
        %v1798 = vadd.f32 0.0, %v1797
        %1799 = vmatmul.bf16.gmra.mxu0 %v1455
        %v1800 = vpop.f32.mrf.mxu0
        %v1801 = vadd.f32 0.0, %v1800
        %v1802 = vpop.f32.mrf.mxu0
        %v1803 = vadd.f32 0.0, %v1802
        %1804 = vdwg.mxu0
        %1805 = vmatpush.bf16.msra.mxu0 0
        %1806 = vmatpush.bf16.msra.mxu0 0
        %1807 = vmatpush.bf16.msra.mxu0 0
        %1808 = vmatpush.bf16.msra.mxu0 0
        %1809 = vmatpush.bf16.msra.mxu0 %v1440
        %1810 = vmatpush.bf16.msra.mxu0 %v1424
        %1811 = vmatpush.bf16.msra.mxu0 %v1408
        %1812 = vmatpush.bf16.msra.mxu0 %v1392
        %1813 = vmatmul.bf16.gmra.mxu0 %v1446
        %v1814 = vpop.f32.mrf.mxu0
        %v1815 = vadd.f32 0.0, %v1814
        %v1816 = vpop.f32.mrf.mxu0
        %v1817 = vadd.f32 0.0, %v1816
        %1818 = vmatmul.bf16.gmra.mxu0 %v1449
        %v1819 = vpop.f32.mrf.mxu0
        %v1820 = vadd.f32 0.0, %v1819
        %v1821 = vpop.f32.mrf.mxu0
        %v1822 = vadd.f32 0.0, %v1821
        %1823 = vmatmul.bf16.gmra.mxu0 %v1452
        %v1824 = vpop.f32.mrf.mxu0
        %v1825 = vadd.f32 0.0, %v1824
        %v1826 = vpop.f32.mrf.mxu0
        %v1827 = vadd.f32 0.0, %v1826
        %1828 = vmatmul.bf16.gmra.mxu0 %v1455
        %v1829 = vpop.f32.mrf.mxu0
        %v1830 = vadd.f32 0.0, %v1829
        %v1831 = vpop.f32.mrf.mxu0
        %v1832 = vadd.f32 0.0, %v1831
        %1833 = vdwg.mxu0
        %1834 = vmatpush.bf16.msra.mxu0 0
        %1835 = vmatpush.bf16.msra.mxu0 0
        %1836 = vmatpush.bf16.msra.mxu0 0
        %1837 = vmatpush.bf16.msra.mxu0 0
        %1838 = vmatpush.bf16.msra.mxu0 %v1441
        %1839 = vmatpush.bf16.msra.mxu0 %v1425
        %1840 = vmatpush.bf16.msra.mxu0 %v1409
        %1841 = vmatpush.bf16.msra.mxu0 %v1393
        %1842 = vmatmul.bf16.gmra.mxu0 %v1446
        %v1843 = vpop.f32.mrf.mxu0
        %v1844 = vadd.f32 0.0, %v1843
        %v1845 = vpop.f32.mrf.mxu0
        %v1846 = vadd.f32 0.0, %v1845
        %1847 = vmatmul.bf16.gmra.mxu0 %v1449
        %v1848 = vpop.f32.mrf.mxu0
        %v1849 = vadd.f32 0.0, %v1848
        %v1850 = vpop.f32.mrf.mxu0
        %v1851 = vadd.f32 0.0, %v1850
        %1852 = vmatmul.bf16.gmra.mxu0 %v1452
        %v1853 = vpop.f32.mrf.mxu0
        %v1854 = vadd.f32 0.0, %v1853
        %v1855 = vpop.f32.mrf.mxu0
        %v1856 = vadd.f32 0.0, %v1855
        %1857 = vmatmul.bf16.gmra.mxu0 %v1455
        %v1858 = vpop.f32.mrf.mxu0
        %v1859 = vadd.f32 0.0, %v1858
        %v1860 = vpop.f32.mrf.mxu0
        %v1861 = vadd.f32 0.0, %v1860
        %1862 = vdwg.mxu0
        %1863 = vmatpush.bf16.msra.mxu0 0
        %1864 = vmatpush.bf16.msra.mxu0 0
        %1865 = vmatpush.bf16.msra.mxu0 0
        %1866 = vmatpush.bf16.msra.mxu0 0
        %1867 = vmatpush.bf16.msra.mxu0 %v1442
        %1868 = vmatpush.bf16.msra.mxu0 %v1426
        %1869 = vmatpush.bf16.msra.mxu0 %v1410
        %1870 = vmatpush.bf16.msra.mxu0 %v1394
        %1871 = vmatmul.bf16.gmra.mxu0 %v1446
        %v1872 = vpop.f32.mrf.mxu0
        %v1873 = vadd.f32 0.0, %v1872
        %v1874 = vpop.f32.mrf.mxu0
        %v1875 = vadd.f32 0.0, %v1874
        %1876 = vmatmul.bf16.gmra.mxu0 %v1449
        %v1877 = vpop.f32.mrf.mxu0
        %v1878 = vadd.f32 0.0, %v1877
        %v1879 = vpop.f32.mrf.mxu0
        %v1880 = vadd.f32 0.0, %v1879
        %1881 = vmatmul.bf16.gmra.mxu0 %v1452
        %v1882 = vpop.f32.mrf.mxu0
        %v1883 = vadd.f32 0.0, %v1882
        %v1884 = vpop.f32.mrf.mxu0
        %v1885 = vadd.f32 0.0, %v1884
        %1886 = vmatmul.bf16.gmra.mxu0 %v1455
        %v1887 = vpop.f32.mrf.mxu0
        %v1888 = vadd.f32 0.0, %v1887
        %v1889 = vpop.f32.mrf.mxu0
        %v1890 = vadd.f32 0.0, %v1889
        %1891 = vdwg.mxu0
        %1892 = vmatpush.bf16.msra.mxu0 0
        %1893 = vmatpush.bf16.msra.mxu0 0
        %1894 = vmatpush.bf16.msra.mxu0 0
        %1895 = vmatpush.bf16.msra.mxu0 0
        %1896 = vmatpush.bf16.msra.mxu0 %v1443
        %1897 = vmatpush.bf16.msra.mxu0 %v1427
        %1898 = vmatpush.bf16.msra.mxu0 %v1411
        %1899 = vmatpush.bf16.msra.mxu0 %v1395
        %1900 = vmatmul.bf16.gmra.mxu0 %v1446
        %v1901 = vpop.f32.mrf.mxu0
        %v1902 = vadd.f32 0.0, %v1901
        %v1903 = vpop.f32.mrf.mxu0
        %v1904 = vadd.f32 0.0, %v1903
        %1905 = vmatmul.bf16.gmra.mxu0 %v1449
        %v1906 = vpop.f32.mrf.mxu0
        %v1907 = vadd.f32 0.0, %v1906
        %v1908 = vpop.f32.mrf.mxu0
        %v1909 = vadd.f32 0.0, %v1908
        %1910 = vmatmul.bf16.gmra.mxu0 %v1452
        %v1911 = vpop.f32.mrf.mxu0
        %v1912 = vadd.f32 0.0, %v1911
        %v1913 = vpop.f32.mrf.mxu0
        %v1914 = vadd.f32 0.0, %v1913
        %1915 = vmatmul.bf16.gmra.mxu0 %v1455
        %v1916 = vpop.f32.mrf.mxu0
        %v1917 = vadd.f32 0.0, %v1916
        %v1918 = vpop.f32.mrf.mxu0
        %v1919 = vadd.f32 0.0, %v1918
        %1920 = vdwg.mxu0
        %v1921 = vld [vmem:[%s3] sm:$0xff]
        %v1922 = vld [vmem:[%s3 + $0x8] sm:$0xff]
        %v1923 = vxor.u32 %v1921, 2147483648
        %v1924 = vxor.u32 %v1922, 2147483648
        %v1925 = vmul.f32 %v1923, 1.442695
        %v1926 = vpow.pop %v1925
        %v1927 = vmul.f32 %v1924, 1.442695
        %v1928 = vpow.pop %v1927
        %v1929 = vadd.f32 %v1926, 1.0
        %v1930 = vadd.f32 %v1928, 1.0
        %v1931 = vrcp.pop %v1929
        %v1932 = vmul.f32 %v1929, %v1931
        %v1933 = vsub.f32 1.0, %v1932
        %v1934 = vmul.f32 %v1931, %v1933
        %v1935 = vadd.f32 %v1931, %v1934
        %vm1936 = vweird.f32 %v1929
        %vm1937 = vweird.f32 %v1931
        %vm1938 = vmor %vm1936, %vm1937
        %v1939 = vsel %vm1938, %v1931, %v1935
        %v1940 = vand.u32 2147483647, %v1929
        %vm1941 = vcmp.eq.f32.partialorder %v1940, 8.507059e+37
        %v1942 = vand.u32 %v1929, 2147483648
        %v1943 = vor.u32 1.1754944e-38, %v1942
        %v1944 = vsel %vm1941, %v1943, %v1939
        %v1945 = vmul.f32 1.0, %v1944
        %v1946 = vrcp.pop %v1930
        %v1947 = vmul.f32 %v1930, %v1946
        %v1948 = vsub.f32 1.0, %v1947
        %v1949 = vmul.f32 %v1946, %v1948
        %v1950 = vadd.f32 %v1946, %v1949
        %vm1951 = vweird.f32 %v1930
        %vm1952 = vweird.f32 %v1946
        %vm1953 = vmor %vm1951, %vm1952
        %v1954 = vsel %vm1953, %v1946, %v1950
        %v1955 = vand.u32 2147483647, %v1930
        %vm1956 = vcmp.eq.f32.partialorder %v1955, 8.507059e+37
        %v1957 = vand.u32 %v1930, 2147483648
        %v1958 = vor.u32 1.1754944e-38, %v1957
        %v1959 = vsel %vm1956, %v1958, %v1954
        %v1960 = vmul.f32 1.0, %v1959
        %v1961 = vsub.f32 1.0, %v1945
        %v1962 = vsub.f32 1.0, %v1960
        %v1963 = vld [vmem:[%s265] sm:$0xff]
        %v1964 = vld [vmem:[%s265 + $0x8] sm:$0xff]
        %v1965 = vld [vmem:[%s265 + $0x10] sm:$0xff]
        %v1966 = vld [vmem:[%s265 + $0x18] sm:$0xff]
        %v1967 = vld [vmem:[%s265 + $0x20] sm:$0xff]
        %v1968 = vld [vmem:[%s265 + $0x28] sm:$0xff]
        %v1969 = vld [vmem:[%s265 + $0x30] sm:$0xff]
        %v1970 = vld [vmem:[%s265 + $0x38] sm:$0xff]
        %v1971 = vld [vmem:[%s265 + $0x40] sm:$0xff]
        %v1972 = vld [vmem:[%s265 + $0x48] sm:$0xff]
        %v1973 = vld [vmem:[%s265 + $0x50] sm:$0xff]
        %v1974 = vld [vmem:[%s265 + $0x58] sm:$0xff]
        %v1975 = vld [vmem:[%s265 + $0x60] sm:$0xff]
        %v1976 = vld [vmem:[%s265 + $0x68] sm:$0xff]
        %v1977 = vld [vmem:[%s265 + $0x70] sm:$0xff]
        %v1978 = vld [vmem:[%s265 + $0x78] sm:$0xff]
        %v1979 = vld [vmem:[%s265 + $0x80] sm:$0xff]
        %v1980 = vld [vmem:[%s265 + $0x88] sm:$0xff]
        %v1981 = vld [vmem:[%s265 + $0x90] sm:$0xff]
        %v1982 = vld [vmem:[%s265 + $0x98] sm:$0xff]
        %v1983 = vld [vmem:[%s265 + $0xa0] sm:$0xff]
        %v1984 = vld [vmem:[%s265 + $0xa8] sm:$0xff]
        %v1985 = vld [vmem:[%s265 + $0xb0] sm:$0xff]
        %v1986 = vld [vmem:[%s265 + $0xb8] sm:$0xff]
        %v1987 = vld [vmem:[%s265 + $0xc0] sm:$0xff]
        %v1988 = vld [vmem:[%s265 + $0xc8] sm:$0xff]
        %v1989 = vld [vmem:[%s265 + $0xd0] sm:$0xff]
        %v1990 = vld [vmem:[%s265 + $0xd8] sm:$0xff]
        %v1991 = vld [vmem:[%s265 + $0xe0] sm:$0xff]
        %v1992 = vld [vmem:[%s265 + $0xe8] sm:$0xff]
        %v1993 = vld [vmem:[%s265 + $0xf0] sm:$0xff]
        %v1994 = vld [vmem:[%s265 + $0xf8] sm:$0xff]
        %v1995 = vld [vmem:[%s265 + $0x100] sm:$0xff]
        %v1996 = vld [vmem:[%s265 + $0x108] sm:$0xff]
        %v1997 = vld [vmem:[%s265 + $0x110] sm:$0xff]
        %v1998 = vld [vmem:[%s265 + $0x118] sm:$0xff]
        %v1999 = vld [vmem:[%s265 + $0x120] sm:$0xff]
        %v2000 = vld [vmem:[%s265 + $0x128] sm:$0xff]
        %v2001 = vld [vmem:[%s265 + $0x130] sm:$0xff]
        %v2002 = vld [vmem:[%s265 + $0x138] sm:$0xff]
        %v2003 = vld [vmem:[%s265 + $0x140] sm:$0xff]
        %v2004 = vld [vmem:[%s265 + $0x148] sm:$0xff]
        %v2005 = vld [vmem:[%s265 + $0x150] sm:$0xff]
        %v2006 = vld [vmem:[%s265 + $0x158] sm:$0xff]
        %v2007 = vld [vmem:[%s265 + $0x160] sm:$0xff]
        %v2008 = vld [vmem:[%s265 + $0x168] sm:$0xff]
        %v2009 = vld [vmem:[%s265 + $0x170] sm:$0xff]
        %v2010 = vld [vmem:[%s265 + $0x178] sm:$0xff]
        %v2011 = vld [vmem:[%s265 + $0x180] sm:$0xff]
        %v2012 = vld [vmem:[%s265 + $0x188] sm:$0xff]
        %v2013 = vld [vmem:[%s265 + $0x190] sm:$0xff]
        %v2014 = vld [vmem:[%s265 + $0x198] sm:$0xff]
        %v2015 = vld [vmem:[%s265 + $0x1a0] sm:$0xff]
        %v2016 = vld [vmem:[%s265 + $0x1a8] sm:$0xff]
        %v2017 = vld [vmem:[%s265 + $0x1b0] sm:$0xff]
        %v2018 = vld [vmem:[%s265 + $0x1b8] sm:$0xff]
        %v2019 = vld [vmem:[%s265 + $0x1c0] sm:$0xff]
        %v2020 = vld [vmem:[%s265 + $0x1c8] sm:$0xff]
        %v2021 = vld [vmem:[%s265 + $0x1d0] sm:$0xff]
        %v2022 = vld [vmem:[%s265 + $0x1d8] sm:$0xff]
        %v2023 = vld [vmem:[%s265 + $0x1e0] sm:$0xff]
        %v2024 = vld [vmem:[%s265 + $0x1e8] sm:$0xff]
        %v2025 = vld [vmem:[%s265 + $0x1f0] sm:$0xff]
        %v2026 = vld [vmem:[%s265 + $0x1f8] sm:$0xff]
        %v2027 = vld [vmem:[%s265 + $0x200] sm:$0xff]
        %v2028 = vld [vmem:[%s265 + $0x208] sm:$0xff]
        %v2029 = vld [vmem:[%s265 + $0x210] sm:$0xff]
        %v2030 = vld [vmem:[%s265 + $0x218] sm:$0xff]
        %v2031 = vld [vmem:[%s265 + $0x220] sm:$0xff]
        %v2032 = vld [vmem:[%s265 + $0x228] sm:$0xff]
        %v2033 = vld [vmem:[%s265 + $0x230] sm:$0xff]
        %v2034 = vld [vmem:[%s265 + $0x238] sm:$0xff]
        %v2035 = vld [vmem:[%s265 + $0x240] sm:$0xff]
        %v2036 = vld [vmem:[%s265 + $0x248] sm:$0xff]
        %v2037 = vld [vmem:[%s265 + $0x250] sm:$0xff]
        %v2038 = vld [vmem:[%s265 + $0x258] sm:$0xff]
        %v2039 = vld [vmem:[%s265 + $0x260] sm:$0xff]
        %v2040 = vld [vmem:[%s265 + $0x268] sm:$0xff]
        %v2041 = vld [vmem:[%s265 + $0x270] sm:$0xff]
        %v2042 = vld [vmem:[%s265 + $0x278] sm:$0xff]
        %v2043 = vld [vmem:[%s265 + $0x280] sm:$0xff]
        %v2044 = vld [vmem:[%s265 + $0x288] sm:$0xff]
        %v2045 = vld [vmem:[%s265 + $0x290] sm:$0xff]
        %v2046 = vld [vmem:[%s265 + $0x298] sm:$0xff]
        %v2047 = vld [vmem:[%s265 + $0x2a0] sm:$0xff]
        %v2048 = vld [vmem:[%s265 + $0x2a8] sm:$0xff]
        %v2049 = vld [vmem:[%s265 + $0x2b0] sm:$0xff]
        %v2050 = vld [vmem:[%s265 + $0x2b8] sm:$0xff]
        %v2051 = vld [vmem:[%s265 + $0x2c0] sm:$0xff]
        %v2052 = vld [vmem:[%s265 + $0x2c8] sm:$0xff]
        %v2053 = vld [vmem:[%s265 + $0x2d0] sm:$0xff]
        %v2054 = vld [vmem:[%s265 + $0x2d8] sm:$0xff]
        %v2055 = vld [vmem:[%s265 + $0x2e0] sm:$0xff]
        %v2056 = vld [vmem:[%s265 + $0x2e8] sm:$0xff]
        %v2057 = vld [vmem:[%s265 + $0x2f0] sm:$0xff]
        %v2058 = vld [vmem:[%s265 + $0x2f8] sm:$0xff]
        %v2059 = vld [vmem:[%s265 + $0x300] sm:$0xff]
        %v2060 = vld [vmem:[%s265 + $0x308] sm:$0xff]
        %v2061 = vld [vmem:[%s265 + $0x310] sm:$0xff]
        %v2062 = vld [vmem:[%s265 + $0x318] sm:$0xff]
        %v2063 = vld [vmem:[%s265 + $0x320] sm:$0xff]
        %v2064 = vld [vmem:[%s265 + $0x328] sm:$0xff]
        %v2065 = vld [vmem:[%s265 + $0x330] sm:$0xff]
        %v2066 = vld [vmem:[%s265 + $0x338] sm:$0xff]
        %v2067 = vld [vmem:[%s265 + $0x340] sm:$0xff]
        %v2068 = vld [vmem:[%s265 + $0x348] sm:$0xff]
        %v2069 = vld [vmem:[%s265 + $0x350] sm:$0xff]
        %v2070 = vld [vmem:[%s265 + $0x358] sm:$0xff]
        %v2071 = vld [vmem:[%s265 + $0x360] sm:$0xff]
        %v2072 = vld [vmem:[%s265 + $0x368] sm:$0xff]
        %v2073 = vld [vmem:[%s265 + $0x370] sm:$0xff]
        %v2074 = vld [vmem:[%s265 + $0x378] sm:$0xff]
        %v2075 = vld [vmem:[%s265 + $0x380] sm:$0xff]
        %v2076 = vld [vmem:[%s265 + $0x388] sm:$0xff]
        %v2077 = vld [vmem:[%s265 + $0x390] sm:$0xff]
        %v2078 = vld [vmem:[%s265 + $0x398] sm:$0xff]
        %v2079 = vld [vmem:[%s265 + $0x3a0] sm:$0xff]
        %v2080 = vld [vmem:[%s265 + $0x3a8] sm:$0xff]
        %v2081 = vld [vmem:[%s265 + $0x3b0] sm:$0xff]
        %v2082 = vld [vmem:[%s265 + $0x3b8] sm:$0xff]
        %v2083 = vld [vmem:[%s265 + $0x3c0] sm:$0xff]
        %v2084 = vld [vmem:[%s265 + $0x3c8] sm:$0xff]
        %v2085 = vld [vmem:[%s265 + $0x3d0] sm:$0xff]
        %v2086 = vld [vmem:[%s265 + $0x3d8] sm:$0xff]
        %v2087 = vld [vmem:[%s265 + $0x3e0] sm:$0xff]
        %v2088 = vld [vmem:[%s265 + $0x3e8] sm:$0xff]
        %v2089 = vld [vmem:[%s265 + $0x3f0] sm:$0xff]
        %v2090 = vld [vmem:[%s265 + $0x3f8] sm:$0xff]
        %v2093 = vperm.slane %v1961, 0
        %v2094 = vperm.slane %v1961, 1
        %v2095 = vperm.slane %v1961, 2
        %v2096 = vperm.slane %v1961, 3
        %v2097 = vperm.slane %v1961, 4
        %v2098 = vperm.slane %v1961, 5
        %v2099 = vperm.slane %v1961, 6
        %v2100 = vperm.slane %v1961, 7
        %v2101 = vperm.slane %v1962, 0
        %v2102 = vperm.slane %v1962, 1
        %v2103 = vperm.slane %v1962, 2
        %v2104 = vperm.slane %v1962, 3
        %v2105 = vperm.slane %v1962, 4
        %v2106 = vperm.slane %v1962, 5
        %v2107 = vperm.slane %v1962, 6
        %v2108 = vperm.slane %v1962, 7
        %v2125 = vmul.f32 %v2093, %v1963
        %v2126 = vmul.f32 %v2094, %v1964
        %v2127 = vmul.f32 %v2095, %v1965
        %v2128 = vmul.f32 %v2096, %v1966
        %v2129 = vmul.f32 %v2097, %v1967
        %v2130 = vmul.f32 %v2098, %v1968
        %v2131 = vmul.f32 %v2099, %v1969
        %v2132 = vmul.f32 %v2100, %v1970
        %v2133 = vmul.f32 %v2101, %v1971
        %v2134 = vmul.f32 %v2102, %v1972
        %v2135 = vmul.f32 %v2103, %v1973
        %v2136 = vmul.f32 %v2104, %v1974
        %v2137 = vmul.f32 %v2105, %v1975
        %v2138 = vmul.f32 %v2106, %v1976
        %v2139 = vmul.f32 %v2107, %v1977
        %v2140 = vmul.f32 %v2108, %v1978
        %v2141 = vmul.f32 %v2093, %v1979
        %v2142 = vmul.f32 %v2094, %v1980
        %v2143 = vmul.f32 %v2095, %v1981
        %v2144 = vmul.f32 %v2096, %v1982
        %v2145 = vmul.f32 %v2097, %v1983
        %v2146 = vmul.f32 %v2098, %v1984
        %v2147 = vmul.f32 %v2099, %v1985
        %v2148 = vmul.f32 %v2100, %v1986
        %v2149 = vmul.f32 %v2101, %v1987
        %v2150 = vmul.f32 %v2102, %v1988
        %v2151 = vmul.f32 %v2103, %v1989
        %v2152 = vmul.f32 %v2104, %v1990
        %v2153 = vmul.f32 %v2105, %v1991
        %v2154 = vmul.f32 %v2106, %v1992
        %v2155 = vmul.f32 %v2107, %v1993
        %v2156 = vmul.f32 %v2108, %v1994
        %v2157 = vmul.f32 %v2093, %v1995
        %v2158 = vmul.f32 %v2094, %v1996
        %v2159 = vmul.f32 %v2095, %v1997
        %v2160 = vmul.f32 %v2096, %v1998
        %v2161 = vmul.f32 %v2097, %v1999
        %v2162 = vmul.f32 %v2098, %v2000
        %v2163 = vmul.f32 %v2099, %v2001
        %v2164 = vmul.f32 %v2100, %v2002
        %v2165 = vmul.f32 %v2101, %v2003
        %v2166 = vmul.f32 %v2102, %v2004
        %v2167 = vmul.f32 %v2103, %v2005
        %v2168 = vmul.f32 %v2104, %v2006
        %v2169 = vmul.f32 %v2105, %v2007
        %v2170 = vmul.f32 %v2106, %v2008
        %v2171 = vmul.f32 %v2107, %v2009
        %v2172 = vmul.f32 %v2108, %v2010
        %v2173 = vmul.f32 %v2093, %v2011
        %v2174 = vmul.f32 %v2094, %v2012
        %v2175 = vmul.f32 %v2095, %v2013
        %v2176 = vmul.f32 %v2096, %v2014
        %v2177 = vmul.f32 %v2097, %v2015
        %v2178 = vmul.f32 %v2098, %v2016
        %v2179 = vmul.f32 %v2099, %v2017
        %v2180 = vmul.f32 %v2100, %v2018
        %v2181 = vmul.f32 %v2101, %v2019
        %v2182 = vmul.f32 %v2102, %v2020
        %v2183 = vmul.f32 %v2103, %v2021
        %v2184 = vmul.f32 %v2104, %v2022
        %v2185 = vmul.f32 %v2105, %v2023
        %v2186 = vmul.f32 %v2106, %v2024
        %v2187 = vmul.f32 %v2107, %v2025
        %v2188 = vmul.f32 %v2108, %v2026
        %v2189 = vmul.f32 %v2093, %v2027
        %v2190 = vmul.f32 %v2094, %v2028
        %v2191 = vmul.f32 %v2095, %v2029
        %v2192 = vmul.f32 %v2096, %v2030
        %v2193 = vmul.f32 %v2097, %v2031
        %v2194 = vmul.f32 %v2098, %v2032
        %v2195 = vmul.f32 %v2099, %v2033
        %v2196 = vmul.f32 %v2100, %v2034
        %v2197 = vmul.f32 %v2101, %v2035
        %v2198 = vmul.f32 %v2102, %v2036
        %v2199 = vmul.f32 %v2103, %v2037
        %v2200 = vmul.f32 %v2104, %v2038
        %v2201 = vmul.f32 %v2105, %v2039
        %v2202 = vmul.f32 %v2106, %v2040
        %v2203 = vmul.f32 %v2107, %v2041
        %v2204 = vmul.f32 %v2108, %v2042
        %v2205 = vmul.f32 %v2093, %v2043
        %v2206 = vmul.f32 %v2094, %v2044
        %v2207 = vmul.f32 %v2095, %v2045
        %v2208 = vmul.f32 %v2096, %v2046
        %v2209 = vmul.f32 %v2097, %v2047
        %v2210 = vmul.f32 %v2098, %v2048
        %v2211 = vmul.f32 %v2099, %v2049
        %v2212 = vmul.f32 %v2100, %v2050
        %v2213 = vmul.f32 %v2101, %v2051
        %v2214 = vmul.f32 %v2102, %v2052
        %v2215 = vmul.f32 %v2103, %v2053
        %v2216 = vmul.f32 %v2104, %v2054
        %v2217 = vmul.f32 %v2105, %v2055
        %v2218 = vmul.f32 %v2106, %v2056
        %v2219 = vmul.f32 %v2107, %v2057
        %v2220 = vmul.f32 %v2108, %v2058
        %v2221 = vmul.f32 %v2093, %v2059
        %v2222 = vmul.f32 %v2094, %v2060
        %v2223 = vmul.f32 %v2095, %v2061
        %v2224 = vmul.f32 %v2096, %v2062
        %v2225 = vmul.f32 %v2097, %v2063
        %v2226 = vmul.f32 %v2098, %v2064
        %v2227 = vmul.f32 %v2099, %v2065
        %v2228 = vmul.f32 %v2100, %v2066
        %v2229 = vmul.f32 %v2101, %v2067
        %v2230 = vmul.f32 %v2102, %v2068
        %v2231 = vmul.f32 %v2103, %v2069
        %v2232 = vmul.f32 %v2104, %v2070
        %v2233 = vmul.f32 %v2105, %v2071
        %v2234 = vmul.f32 %v2106, %v2072
        %v2235 = vmul.f32 %v2107, %v2073
        %v2236 = vmul.f32 %v2108, %v2074
        %v2237 = vmul.f32 %v2093, %v2075
        %v2238 = vmul.f32 %v2094, %v2076
        %v2239 = vmul.f32 %v2095, %v2077
        %v2240 = vmul.f32 %v2096, %v2078
        %v2241 = vmul.f32 %v2097, %v2079
        %v2242 = vmul.f32 %v2098, %v2080
        %v2243 = vmul.f32 %v2099, %v2081
        %v2244 = vmul.f32 %v2100, %v2082
        %v2245 = vmul.f32 %v2101, %v2083
        %v2246 = vmul.f32 %v2102, %v2084
        %v2247 = vmul.f32 %v2103, %v2085
        %v2248 = vmul.f32 %v2104, %v2086
        %v2249 = vmul.f32 %v2105, %v2087
        %v2250 = vmul.f32 %v2106, %v2088
        %v2251 = vmul.f32 %v2107, %v2089
        %v2252 = vmul.f32 %v2108, %v2090
        %v2255 = vperm.slane %v1945, 0
        %v2256 = vperm.slane %v1945, 1
        %v2257 = vperm.slane %v1945, 2
        %v2258 = vperm.slane %v1945, 3
        %v2259 = vperm.slane %v1945, 4
        %v2260 = vperm.slane %v1945, 5
        %v2261 = vperm.slane %v1945, 6
        %v2262 = vperm.slane %v1945, 7
        %v2263 = vperm.slane %v1960, 0
        %v2264 = vperm.slane %v1960, 1
        %v2265 = vperm.slane %v1960, 2
        %v2266 = vperm.slane %v1960, 3
        %v2267 = vperm.slane %v1960, 4
        %v2268 = vperm.slane %v1960, 5
        %v2269 = vperm.slane %v1960, 6
        %v2270 = vperm.slane %v1960, 7
        %v2287 = vmul.f32 %v2255, %v1467
        %v2288 = vmul.f32 %v2256, %v1496
        %v2289 = vmul.f32 %v2257, %v1525
        %v2290 = vmul.f32 %v2258, %v1554
        %v2291 = vmul.f32 %v2259, %v1583
        %v2292 = vmul.f32 %v2260, %v1612
        %v2293 = vmul.f32 %v2261, %v1641
        %v2294 = vmul.f32 %v2262, %v1670
        %v2295 = vmul.f32 %v2263, %v1699
        %v2296 = vmul.f32 %v2264, %v1728
        %v2297 = vmul.f32 %v2265, %v1757
        %v2298 = vmul.f32 %v2266, %v1786
        %v2299 = vmul.f32 %v2267, %v1815
        %v2300 = vmul.f32 %v2268, %v1844
        %v2301 = vmul.f32 %v2269, %v1873
        %v2302 = vmul.f32 %v2270, %v1902
        %v2303 = vmul.f32 %v2255, %v1469
        %v2304 = vmul.f32 %v2256, %v1498
        %v2305 = vmul.f32 %v2257, %v1527
        %v2306 = vmul.f32 %v2258, %v1556
        %v2307 = vmul.f32 %v2259, %v1585
        %v2308 = vmul.f32 %v2260, %v1614
        %v2309 = vmul.f32 %v2261, %v1643
        %v2310 = vmul.f32 %v2262, %v1672
        %v2311 = vmul.f32 %v2263, %v1701
        %v2312 = vmul.f32 %v2264, %v1730
        %v2313 = vmul.f32 %v2265, %v1759
        %v2314 = vmul.f32 %v2266, %v1788
        %v2315 = vmul.f32 %v2267, %v1817
        %v2316 = vmul.f32 %v2268, %v1846
        %v2317 = vmul.f32 %v2269, %v1875
        %v2318 = vmul.f32 %v2270, %v1904
        %v2319 = vmul.f32 %v2255, %v1472
        %v2320 = vmul.f32 %v2256, %v1501
        %v2321 = vmul.f32 %v2257, %v1530
        %v2322 = vmul.f32 %v2258, %v1559
        %v2323 = vmul.f32 %v2259, %v1588
        %v2324 = vmul.f32 %v2260, %v1617
        %v2325 = vmul.f32 %v2261, %v1646
        %v2326 = vmul.f32 %v2262, %v1675
        %v2327 = vmul.f32 %v2263, %v1704
        %v2328 = vmul.f32 %v2264, %v1733
        %v2329 = vmul.f32 %v2265, %v1762
        %v2330 = vmul.f32 %v2266, %v1791
        %v2331 = vmul.f32 %v2267, %v1820
        %v2332 = vmul.f32 %v2268, %v1849
        %v2333 = vmul.f32 %v2269, %v1878
        %v2334 = vmul.f32 %v2270, %v1907
        %v2335 = vmul.f32 %v2255, %v1474
        %v2336 = vmul.f32 %v2256, %v1503
        %v2337 = vmul.f32 %v2257, %v1532
        %v2338 = vmul.f32 %v2258, %v1561
        %v2339 = vmul.f32 %v2259, %v1590
        %v2340 = vmul.f32 %v2260, %v1619
        %v2341 = vmul.f32 %v2261, %v1648
        %v2342 = vmul.f32 %v2262, %v1677
        %v2343 = vmul.f32 %v2263, %v1706
        %v2344 = vmul.f32 %v2264, %v1735
        %v2345 = vmul.f32 %v2265, %v1764
        %v2346 = vmul.f32 %v2266, %v1793
        %v2347 = vmul.f32 %v2267, %v1822
        %v2348 = vmul.f32 %v2268, %v1851
        %v2349 = vmul.f32 %v2269, %v1880
        %v2350 = vmul.f32 %v2270, %v1909
        %v2351 = vmul.f32 %v2255, %v1477
        %v2352 = vmul.f32 %v2256, %v1506
        %v2353 = vmul.f32 %v2257, %v1535
        %v2354 = vmul.f32 %v2258, %v1564
        %v2355 = vmul.f32 %v2259, %v1593
        %v2356 = vmul.f32 %v2260, %v1622
        %v2357 = vmul.f32 %v2261, %v1651
        %v2358 = vmul.f32 %v2262, %v1680
        %v2359 = vmul.f32 %v2263, %v1709
        %v2360 = vmul.f32 %v2264, %v1738
        %v2361 = vmul.f32 %v2265, %v1767
        %v2362 = vmul.f32 %v2266, %v1796
        %v2363 = vmul.f32 %v2267, %v1825
        %v2364 = vmul.f32 %v2268, %v1854
        %v2365 = vmul.f32 %v2269, %v1883
        %v2366 = vmul.f32 %v2270, %v1912
        %v2367 = vmul.f32 %v2255, %v1479
        %v2368 = vmul.f32 %v2256, %v1508
        %v2369 = vmul.f32 %v2257, %v1537
        %v2370 = vmul.f32 %v2258, %v1566
        %v2371 = vmul.f32 %v2259, %v1595
        %v2372 = vmul.f32 %v2260, %v1624
        %v2373 = vmul.f32 %v2261, %v1653
        %v2374 = vmul.f32 %v2262, %v1682
        %v2375 = vmul.f32 %v2263, %v1711
        %v2376 = vmul.f32 %v2264, %v1740
        %v2377 = vmul.f32 %v2265, %v1769
        %v2378 = vmul.f32 %v2266, %v1798
        %v2379 = vmul.f32 %v2267, %v1827
        %v2380 = vmul.f32 %v2268, %v1856
        %v2381 = vmul.f32 %v2269, %v1885
        %v2382 = vmul.f32 %v2270, %v1914
        %v2383 = vmul.f32 %v2255, %v1482
        %v2384 = vmul.f32 %v2256, %v1511
        %v2385 = vmul.f32 %v2257, %v1540
        %v2386 = vmul.f32 %v2258, %v1569
        %v2387 = vmul.f32 %v2259, %v1598
        %v2388 = vmul.f32 %v2260, %v1627
        %v2389 = vmul.f32 %v2261, %v1656
        %v2390 = vmul.f32 %v2262, %v1685
        %v2391 = vmul.f32 %v2263, %v1714
        %v2392 = vmul.f32 %v2264, %v1743
        %v2393 = vmul.f32 %v2265, %v1772
        %v2394 = vmul.f32 %v2266, %v1801
        %v2395 = vmul.f32 %v2267, %v1830
        %v2396 = vmul.f32 %v2268, %v1859
        %v2397 = vmul.f32 %v2269, %v1888
        %v2398 = vmul.f32 %v2270, %v1917
        %v2399 = vmul.f32 %v2255, %v1484
        %v2400 = vmul.f32 %v2256, %v1513
        %v2401 = vmul.f32 %v2257, %v1542
        %v2402 = vmul.f32 %v2258, %v1571
        %v2403 = vmul.f32 %v2259, %v1600
        %v2404 = vmul.f32 %v2260, %v1629
        %v2405 = vmul.f32 %v2261, %v1658
        %v2406 = vmul.f32 %v2262, %v1687
        %v2407 = vmul.f32 %v2263, %v1716
        %v2408 = vmul.f32 %v2264, %v1745
        %v2409 = vmul.f32 %v2265, %v1774
        %v2410 = vmul.f32 %v2266, %v1803
        %v2411 = vmul.f32 %v2267, %v1832
        %v2412 = vmul.f32 %v2268, %v1861
        %v2413 = vmul.f32 %v2269, %v1890
        %v2414 = vmul.f32 %v2270, %v1919
        %v2415 = vadd.f32 %v2125, %v2287
        %v2416 = vadd.f32 %v2126, %v2288
        %v2417 = vadd.f32 %v2127, %v2289
        %v2418 = vadd.f32 %v2128, %v2290
        %v2419 = vadd.f32 %v2129, %v2291
        %v2420 = vadd.f32 %v2130, %v2292
        %v2421 = vadd.f32 %v2131, %v2293
        %v2422 = vadd.f32 %v2132, %v2294
        %v2423 = vadd.f32 %v2133, %v2295
        %v2424 = vadd.f32 %v2134, %v2296
        %v2425 = vadd.f32 %v2135, %v2297
        %v2426 = vadd.f32 %v2136, %v2298
        %v2427 = vadd.f32 %v2137, %v2299
        %v2428 = vadd.f32 %v2138, %v2300
        %v2429 = vadd.f32 %v2139, %v2301
        %v2430 = vadd.f32 %v2140, %v2302
        %v2431 = vadd.f32 %v2141, %v2303
        %v2432 = vadd.f32 %v2142, %v2304
        %v2433 = vadd.f32 %v2143, %v2305
        %v2434 = vadd.f32 %v2144, %v2306
        %v2435 = vadd.f32 %v2145, %v2307
        %v2436 = vadd.f32 %v2146, %v2308
        %v2437 = vadd.f32 %v2147, %v2309
        %v2438 = vadd.f32 %v2148, %v2310
        %v2439 = vadd.f32 %v2149, %v2311
        %v2440 = vadd.f32 %v2150, %v2312
        %v2441 = vadd.f32 %v2151, %v2313
        %v2442 = vadd.f32 %v2152, %v2314
        %v2443 = vadd.f32 %v2153, %v2315
        %v2444 = vadd.f32 %v2154, %v2316
        %v2445 = vadd.f32 %v2155, %v2317
        %v2446 = vadd.f32 %v2156, %v2318
        %v2447 = vadd.f32 %v2157, %v2319
        %v2448 = vadd.f32 %v2158, %v2320
        %v2449 = vadd.f32 %v2159, %v2321
        %v2450 = vadd.f32 %v2160, %v2322
        %v2451 = vadd.f32 %v2161, %v2323
        %v2452 = vadd.f32 %v2162, %v2324
        %v2453 = vadd.f32 %v2163, %v2325
        %v2454 = vadd.f32 %v2164, %v2326
        %v2455 = vadd.f32 %v2165, %v2327
        %v2456 = vadd.f32 %v2166, %v2328
        %v2457 = vadd.f32 %v2167, %v2329
        %v2458 = vadd.f32 %v2168, %v2330
        %v2459 = vadd.f32 %v2169, %v2331
        %v2460 = vadd.f32 %v2170, %v2332
        %v2461 = vadd.f32 %v2171, %v2333
        %v2462 = vadd.f32 %v2172, %v2334
        %v2463 = vadd.f32 %v2173, %v2335
        %v2464 = vadd.f32 %v2174, %v2336
        %v2465 = vadd.f32 %v2175, %v2337
        %v2466 = vadd.f32 %v2176, %v2338
        %v2467 = vadd.f32 %v2177, %v2339
        %v2468 = vadd.f32 %v2178, %v2340
        %v2469 = vadd.f32 %v2179, %v2341
        %v2470 = vadd.f32 %v2180, %v2342
        %v2471 = vadd.f32 %v2181, %v2343
        %v2472 = vadd.f32 %v2182, %v2344
        %v2473 = vadd.f32 %v2183, %v2345
        %v2474 = vadd.f32 %v2184, %v2346
        %v2475 = vadd.f32 %v2185, %v2347
        %v2476 = vadd.f32 %v2186, %v2348
        %v2477 = vadd.f32 %v2187, %v2349
        %v2478 = vadd.f32 %v2188, %v2350
        %v2479 = vadd.f32 %v2189, %v2351
        %v2480 = vadd.f32 %v2190, %v2352
        %v2481 = vadd.f32 %v2191, %v2353
        %v2482 = vadd.f32 %v2192, %v2354
        %v2483 = vadd.f32 %v2193, %v2355
        %v2484 = vadd.f32 %v2194, %v2356
        %v2485 = vadd.f32 %v2195, %v2357
        %v2486 = vadd.f32 %v2196, %v2358
        %v2487 = vadd.f32 %v2197, %v2359
        %v2488 = vadd.f32 %v2198, %v2360
        %v2489 = vadd.f32 %v2199, %v2361
        %v2490 = vadd.f32 %v2200, %v2362
        %v2491 = vadd.f32 %v2201, %v2363
        %v2492 = vadd.f32 %v2202, %v2364
        %v2493 = vadd.f32 %v2203, %v2365
        %v2494 = vadd.f32 %v2204, %v2366
        %v2495 = vadd.f32 %v2205, %v2367
        %v2496 = vadd.f32 %v2206, %v2368
        %v2497 = vadd.f32 %v2207, %v2369
        %v2498 = vadd.f32 %v2208, %v2370
        %v2499 = vadd.f32 %v2209, %v2371
        %v2500 = vadd.f32 %v2210, %v2372
        %v2501 = vadd.f32 %v2211, %v2373
        %v2502 = vadd.f32 %v2212, %v2374
        %v2503 = vadd.f32 %v2213, %v2375
        %v2504 = vadd.f32 %v2214, %v2376
        %v2505 = vadd.f32 %v2215, %v2377
        %v2506 = vadd.f32 %v2216, %v2378
        %v2507 = vadd.f32 %v2217, %v2379
        %v2508 = vadd.f32 %v2218, %v2380
        %v2509 = vadd.f32 %v2219, %v2381
        %v2510 = vadd.f32 %v2220, %v2382
        %v2511 = vadd.f32 %v2221, %v2383
        %v2512 = vadd.f32 %v2222, %v2384
        %v2513 = vadd.f32 %v2223, %v2385
        %v2514 = vadd.f32 %v2224, %v2386
        %v2515 = vadd.f32 %v2225, %v2387
        %v2516 = vadd.f32 %v2226, %v2388
        %v2517 = vadd.f32 %v2227, %v2389
        %v2518 = vadd.f32 %v2228, %v2390
        %v2519 = vadd.f32 %v2229, %v2391
        %v2520 = vadd.f32 %v2230, %v2392
        %v2521 = vadd.f32 %v2231, %v2393
        %v2522 = vadd.f32 %v2232, %v2394
        %v2523 = vadd.f32 %v2233, %v2395
        %v2524 = vadd.f32 %v2234, %v2396
        %v2525 = vadd.f32 %v2235, %v2397
        %v2526 = vadd.f32 %v2236, %v2398
        %v2527 = vadd.f32 %v2237, %v2399
        %v2528 = vadd.f32 %v2238, %v2400
        %v2529 = vadd.f32 %v2239, %v2401
        %v2530 = vadd.f32 %v2240, %v2402
        %v2531 = vadd.f32 %v2241, %v2403
        %v2532 = vadd.f32 %v2242, %v2404
        %v2533 = vadd.f32 %v2243, %v2405
        %v2534 = vadd.f32 %v2244, %v2406
        %v2535 = vadd.f32 %v2245, %v2407
        %v2536 = vadd.f32 %v2246, %v2408
        %v2537 = vadd.f32 %v2247, %v2409
        %v2538 = vadd.f32 %v2248, %v2410
        %v2539 = vadd.f32 %v2249, %v2411
        %v2540 = vadd.f32 %v2250, %v2412
        %v2541 = vadd.f32 %v2251, %v2413
        %v2542 = vadd.f32 %v2252, %v2414
        %2543 = vst [vmem:[%s304] sm:$0xff] %v2415
        %2544 = vst [vmem:[%s304 + $0x8] sm:$0xff] %v2416
        %2545 = vst [vmem:[%s304 + $0x10] sm:$0xff] %v2417
        %2546 = vst [vmem:[%s304 + $0x18] sm:$0xff] %v2418
        %2547 = vst [vmem:[%s304 + $0x20] sm:$0xff] %v2419
        %2548 = vst [vmem:[%s304 + $0x28] sm:$0xff] %v2420
        %2549 = vst [vmem:[%s304 + $0x30] sm:$0xff] %v2421
        %2550 = vst [vmem:[%s304 + $0x38] sm:$0xff] %v2422
        %2551 = vst [vmem:[%s304 + $0x40] sm:$0xff] %v2423
        %2552 = vst [vmem:[%s304 + $0x48] sm:$0xff] %v2424
        %2553 = vst [vmem:[%s304 + $0x50] sm:$0xff] %v2425
        %2554 = vst [vmem:[%s304 + $0x58] sm:$0xff] %v2426
        %2555 = vst [vmem:[%s304 + $0x60] sm:$0xff] %v2427
        %2556 = vst [vmem:[%s304 + $0x68] sm:$0xff] %v2428
        %2557 = vst [vmem:[%s304 + $0x70] sm:$0xff] %v2429
        %2558 = vst [vmem:[%s304 + $0x78] sm:$0xff] %v2430
        %2559 = vst [vmem:[%s304 + $0x80] sm:$0xff] %v2431
        %2560 = vst [vmem:[%s304 + $0x88] sm:$0xff] %v2432
        %2561 = vst [vmem:[%s304 + $0x90] sm:$0xff] %v2433
        %2562 = vst [vmem:[%s304 + $0x98] sm:$0xff] %v2434
        %2563 = vst [vmem:[%s304 + $0xa0] sm:$0xff] %v2435
        %2564 = vst [vmem:[%s304 + $0xa8] sm:$0xff] %v2436
        %2565 = vst [vmem:[%s304 + $0xb0] sm:$0xff] %v2437
        %2566 = vst [vmem:[%s304 + $0xb8] sm:$0xff] %v2438
        %2567 = vst [vmem:[%s304 + $0xc0] sm:$0xff] %v2439
        %2568 = vst [vmem:[%s304 + $0xc8] sm:$0xff] %v2440
        %2569 = vst [vmem:[%s304 + $0xd0] sm:$0xff] %v2441
        %2570 = vst [vmem:[%s304 + $0xd8] sm:$0xff] %v2442
        %2571 = vst [vmem:[%s304 + $0xe0] sm:$0xff] %v2443
        %2572 = vst [vmem:[%s304 + $0xe8] sm:$0xff] %v2444
        %2573 = vst [vmem:[%s304 + $0xf0] sm:$0xff] %v2445
        %2574 = vst [vmem:[%s304 + $0xf8] sm:$0xff] %v2446
        %2575 = vst [vmem:[%s304 + $0x100] sm:$0xff] %v2447
        %2576 = vst [vmem:[%s304 + $0x108] sm:$0xff] %v2448
        %2577 = vst [vmem:[%s304 + $0x110] sm:$0xff] %v2449
        %2578 = vst [vmem:[%s304 + $0x118] sm:$0xff] %v2450
        %2579 = vst [vmem:[%s304 + $0x120] sm:$0xff] %v2451
        %2580 = vst [vmem:[%s304 + $0x128] sm:$0xff] %v2452
        %2581 = vst [vmem:[%s304 + $0x130] sm:$0xff] %v2453
        %2582 = vst [vmem:[%s304 + $0x138] sm:$0xff] %v2454
        %2583 = vst [vmem:[%s304 + $0x140] sm:$0xff] %v2455
        %2584 = vst [vmem:[%s304 + $0x148] sm:$0xff] %v2456
        %2585 = vst [vmem:[%s304 + $0x150] sm:$0xff] %v2457
        %2586 = vst [vmem:[%s304 + $0x158] sm:$0xff] %v2458
        %2587 = vst [vmem:[%s304 + $0x160] sm:$0xff] %v2459
        %2588 = vst [vmem:[%s304 + $0x168] sm:$0xff] %v2460
        %2589 = vst [vmem:[%s304 + $0x170] sm:$0xff] %v2461
        %2590 = vst [vmem:[%s304 + $0x178] sm:$0xff] %v2462
        %2591 = vst [vmem:[%s304 + $0x180] sm:$0xff] %v2463
        %2592 = vst [vmem:[%s304 + $0x188] sm:$0xff] %v2464
        %2593 = vst [vmem:[%s304 + $0x190] sm:$0xff] %v2465
        %2594 = vst [vmem:[%s304 + $0x198] sm:$0xff] %v2466
        %2595 = vst [vmem:[%s304 + $0x1a0] sm:$0xff] %v2467
        %2596 = vst [vmem:[%s304 + $0x1a8] sm:$0xff] %v2468
        %2597 = vst [vmem:[%s304 + $0x1b0] sm:$0xff] %v2469
        %2598 = vst [vmem:[%s304 + $0x1b8] sm:$0xff] %v2470
        %2599 = vst [vmem:[%s304 + $0x1c0] sm:$0xff] %v2471
        %2600 = vst [vmem:[%s304 + $0x1c8] sm:$0xff] %v2472
        %2601 = vst [vmem:[%s304 + $0x1d0] sm:$0xff] %v2473
        %2602 = vst [vmem:[%s304 + $0x1d8] sm:$0xff] %v2474
        %2603 = vst [vmem:[%s304 + $0x1e0] sm:$0xff] %v2475
        %2604 = vst [vmem:[%s304 + $0x1e8] sm:$0xff] %v2476
        %2605 = vst [vmem:[%s304 + $0x1f0] sm:$0xff] %v2477
        %2606 = vst [vmem:[%s304 + $0x1f8] sm:$0xff] %v2478
        %2607 = vst [vmem:[%s304 + $0x200] sm:$0xff] %v2479
        %2608 = vst [vmem:[%s304 + $0x208] sm:$0xff] %v2480
        %2609 = vst [vmem:[%s304 + $0x210] sm:$0xff] %v2481
        %2610 = vst [vmem:[%s304 + $0x218] sm:$0xff] %v2482
        %2611 = vst [vmem:[%s304 + $0x220] sm:$0xff] %v2483
        %2612 = vst [vmem:[%s304 + $0x228] sm:$0xff] %v2484
        %2613 = vst [vmem:[%s304 + $0x230] sm:$0xff] %v2485
        %2614 = vst [vmem:[%s304 + $0x238] sm:$0xff] %v2486
        %2615 = vst [vmem:[%s304 + $0x240] sm:$0xff] %v2487
        %2616 = vst [vmem:[%s304 + $0x248] sm:$0xff] %v2488
        %2617 = vst [vmem:[%s304 + $0x250] sm:$0xff] %v2489
        %2618 = vst [vmem:[%s304 + $0x258] sm:$0xff] %v2490
        %2619 = vst [vmem:[%s304 + $0x260] sm:$0xff] %v2491
        %2620 = vst [vmem:[%s304 + $0x268] sm:$0xff] %v2492
        %2621 = vst [vmem:[%s304 + $0x270] sm:$0xff] %v2493
        %2622 = vst [vmem:[%s304 + $0x278] sm:$0xff] %v2494
        %2623 = vst [vmem:[%s304 + $0x280] sm:$0xff] %v2495
        %2624 = vst [vmem:[%s304 + $0x288] sm:$0xff] %v2496
        %2625 = vst [vmem:[%s304 + $0x290] sm:$0xff] %v2497
        %2626 = vst [vmem:[%s304 + $0x298] sm:$0xff] %v2498
        %2627 = vst [vmem:[%s304 + $0x2a0] sm:$0xff] %v2499
        %2628 = vst [vmem:[%s304 + $0x2a8] sm:$0xff] %v2500
        %2629 = vst [vmem:[%s304 + $0x2b0] sm:$0xff] %v2501
        %2630 = vst [vmem:[%s304 + $0x2b8] sm:$0xff] %v2502
        %2631 = vst [vmem:[%s304 + $0x2c0] sm:$0xff] %v2503
        %2632 = vst [vmem:[%s304 + $0x2c8] sm:$0xff] %v2504
        %2633 = vst [vmem:[%s304 + $0x2d0] sm:$0xff] %v2505
        %2634 = vst [vmem:[%s304 + $0x2d8] sm:$0xff] %v2506
        %2635 = vst [vmem:[%s304 + $0x2e0] sm:$0xff] %v2507
        %2636 = vst [vmem:[%s304 + $0x2e8] sm:$0xff] %v2508
        %2637 = vst [vmem:[%s304 + $0x2f0] sm:$0xff] %v2509
        %2638 = vst [vmem:[%s304 + $0x2f8] sm:$0xff] %v2510
        %2639 = vst [vmem:[%s304 + $0x300] sm:$0xff] %v2511
        %2640 = vst [vmem:[%s304 + $0x308] sm:$0xff] %v2512
        %2641 = vst [vmem:[%s304 + $0x310] sm:$0xff] %v2513
        %2642 = vst [vmem:[%s304 + $0x318] sm:$0xff] %v2514
        %2643 = vst [vmem:[%s304 + $0x320] sm:$0xff] %v2515
        %2644 = vst [vmem:[%s304 + $0x328] sm:$0xff] %v2516
        %2645 = vst [vmem:[%s304 + $0x330] sm:$0xff] %v2517
        %2646 = vst [vmem:[%s304 + $0x338] sm:$0xff] %v2518
        %2647 = vst [vmem:[%s304 + $0x340] sm:$0xff] %v2519
        %2648 = vst [vmem:[%s304 + $0x348] sm:$0xff] %v2520
        %2649 = vst [vmem:[%s304 + $0x350] sm:$0xff] %v2521
        %2650 = vst [vmem:[%s304 + $0x358] sm:$0xff] %v2522
        %2651 = vst [vmem:[%s304 + $0x360] sm:$0xff] %v2523
        %2652 = vst [vmem:[%s304 + $0x368] sm:$0xff] %v2524
        %2653 = vst [vmem:[%s304 + $0x370] sm:$0xff] %v2525
        %2654 = vst [vmem:[%s304 + $0x378] sm:$0xff] %v2526
        %2655 = vst [vmem:[%s304 + $0x380] sm:$0xff] %v2527
        %2656 = vst [vmem:[%s304 + $0x388] sm:$0xff] %v2528
        %2657 = vst [vmem:[%s304 + $0x390] sm:$0xff] %v2529
        %2658 = vst [vmem:[%s304 + $0x398] sm:$0xff] %v2530
        %2659 = vst [vmem:[%s304 + $0x3a0] sm:$0xff] %v2531
        %2660 = vst [vmem:[%s304 + $0x3a8] sm:$0xff] %v2532
        %2661 = vst [vmem:[%s304 + $0x3b0] sm:$0xff] %v2533
        %2662 = vst [vmem:[%s304 + $0x3b8] sm:$0xff] %v2534
        %2663 = vst [vmem:[%s304 + $0x3c0] sm:$0xff] %v2535
        %2664 = vst [vmem:[%s304 + $0x3c8] sm:$0xff] %v2536
        %2665 = vst [vmem:[%s304 + $0x3d0] sm:$0xff] %v2537
        %2666 = vst [vmem:[%s304 + $0x3d8] sm:$0xff] %v2538
        %2667 = vst [vmem:[%s304 + $0x3e0] sm:$0xff] %v2539
        %2668 = vst [vmem:[%s304 + $0x3e8] sm:$0xff] %v2540
        %2669 = vst [vmem:[%s304 + $0x3f0] sm:$0xff] %v2541
        %2670 = vst [vmem:[%s304 + $0x3f8] sm:$0xff] %v2542
        %s2671 = sand.u32 %s149, 1
        %s2672 = scalar_lea.sflag [#allocation4], %s2671
        %s2673 = sand.u32 %s149, 1
        %s2674 = smul.addr %s2673, 1024
        %s2675 = scalar_lea.vmem [#allocation7], %s2674
        // Predicated region
        $region45: #{warpnet_forward.1} parent=35 // pred_check
          %p2676 = pneg %p159
        $region46: #{warpnet_forward.1} parent=35 // pred_check_branch
          %2678 = sbr.rel (%p2676) target = $region48
        $region47: #{warpnet_forward.1} parent=35 // pred_region
          %s2679 = smul.u32 8, %s29
          %2681 = vsyncadd %s2672, 0
          %s2682 = smul.addr %s2679, 16
          %s2683 = smul.addr %s28, 128
          %s2684 = sadd.s32 %s2682, %s2683
          %s2685 = smul.addr %s2684, 8
          %s2686 = scalar_lea.hbm %s4, %s2685
          %s2687 = sshll.u32 %s2675, 4
          %s2688 = int_to_ptr.vmem [resolvable:$true] %s2687
          %s2689 = sshll.u32 %s2686, 4
          %s2690 = int_to_ptr.hbm [resolvable:$true] %s2689
          %2695 = dma.vmem_to_hbm [thread:$0]  %s2688, 16384, %s2690, %s2672, 2048, 2048, 128
        $region48: #{warpnet_forward.1} parent=35 // pred_fallthru
          _
      $region36: #{warpnet_forward.1} parent=5 // pred_fallthru
        _
      %p2696 = scmp.le.s32.totalorder 2, %s19
      // Predicated region
      $region49: #{warpnet_forward.1} parent=5 // pred_check
        %p2697 = pneg %p2696
      $region50: #{warpnet_forward.1} parent=5 // pred_check_branch
        %2699 = sbr.rel (%p2697) target = $region52
      $region51: #{warpnet_forward.1} parent=5 // pred_region
        %s2700 = ssub.s32 %s19, 2
        // Predicated region
        $region53: #{warpnet_forward.1} parent=51 // pred_check
          %p2701 = pneg %p165
        $region54: #{warpnet_forward.1} parent=51 // pred_check_branch
          %2703 = sbr.rel (%p2701) target = $region56
        $region55: #{warpnet_forward.1} parent=51 // pred_region
          %s2704 = sand.u32 %s150, 1
          %s2705 = scalar_lea.sflag [#allocation4], %s2704
          %s2706 = sand.u32 %s150, 1
          %s2707 = smul.addr %s2706, 1024
          %s2708 = scalar_lea.vmem [#allocation7], %s2707
          %2710 = dma.done %s2705, 16384
        $region56: #{warpnet_forward.1} parent=51 // pred_fallthru
          _
      $region52: #{warpnet_forward.1} parent=5 // pred_fallthru
        _
    $region6: #{warpnet_forward.1} parent=1 // loop_footer
      %s23 = sadd.s32 1, %s19
    $region7: #{warpnet_forward.1} parent=1 // loop_footer_branch
      %18 = sbr.rel target = $region3
    $region8: #{warpnet_forward.1} parent=1 // loop_exit
      _
    %2711 = vsyncpa [#allocation3], 1
    %s2712 = scalar_lea.sflag [#allocation3], 1
    %2713 = vsyncpa %s2712, 1
    %2714 = vsyncpa [#allocation6], 1
    %s2715 = scalar_lea.sflag [#allocation6], 1
    %2716 = vsyncpa %s2715, 1
    %2717 = vsyncpa [#allocation4], 1
    %s2718 = scalar_lea.sflag [#allocation4], 1
    %2719 = vsyncpa %s2718, 1

</llo_original>
